<compile_context>
chip_gen: v5e
topology: v5e:2x2
jax: 0.10.0
libtpu: 0.0.40
codegen_flags: <defaults>
</compile_context>

<pallas_src>
import jax
import jax.numpy as jnp
from jax.experimental import pallas as pl
from jax.experimental.pallas import tpu as pltpu

SURVIVAL_DISTRIBUTION_CONFIGS = {
    'ggd': (3, [0, 1, 1]),
    'gamma': (2, [1, 1]),
    'exp': (1, [1]),
    'lnormal': (2, [1, 1]),
}


def _vmem():
    return pl.BlockSpec(memory_space=pltpu.MemorySpace.VMEM)


def _gru_step(h, xg, whh, bhh, H):
    """One PyTorch-semantics GRU step with pre-projected inputs.

    h:   (B, H)   previous hidden state
    xg:  (B, 3H)  x_t @ W_ih + b_ih   (gate order r, z, n)
    whh: (H, 3H)  concatenated recurrent weights
    bhh: (1, 3H)  concatenated recurrent biases
    """
    hg = jnp.dot(h, whh, preferred_element_type=jnp.float32) + bhh   # (B, 3H)
    r = jax.nn.sigmoid(xg[:, :H] + hg[:, :H])
    z = jax.nn.sigmoid(xg[:, H:2 * H] + hg[:, H:2 * H])
    n = jnp.tanh(xg[:, 2 * H:] + r * hg[:, 2 * H:])
    return (1.0 - z) * n + z * h


def _fused_forward_kernel(x_ref, h0m_ref, h0b_ref,
                          wih_m_ref, whh_m_ref, bih_m_ref, bhh_m_ref,
                          wih_b_ref, whh_b_ref, bih_b_ref, bhh_b_ref,
                          w_head_ref, b_head_ref, mask_ref,
                          cov_ref, combined_ref):
    # x: (T*B, Din) flattened sequence-major; h0m: (B, P); h0b: (B, Hd)
    # main GRU weights: wih (Din,3P), whh (P,3P), biases (1,3P)
    # basic GRU weights: wih (Din,3Hd), whh (Hd,3Hd), biases (1,3Hd)
    # head: w (Hd, P+D), b (1, P+D); mask: (1, P)
    # outputs: cov (B, (T-1)*D), combined (B, T*P)
    TB, _ = x_ref.shape
    B, P = h0m_ref.shape
    Hd = h0b_ref.shape[-1]
    D = w_head_ref.shape[-1] - P
    T = TB // B

    # Load weights / biases / mask once (hoisted out of the unrolled loop).
    whh_m = whh_m_ref[...]
    bhh_m = bhh_m_ref[...]
    whh_b = whh_b_ref[...]
    bhh_b = bhh_b_ref[...]
    w_head = w_head_ref[...]
    b_head = b_head_ref[...]
    mask = mask_ref[...]                                              # (1, P)

    # Hoisted input projections: one full-sequence matmul per GRU instead of
    # 3*T tiny matmuls on the serial critical path.
    x2 = x_ref[...]                                                   # (T*B, Din)
    xproj_m = jnp.dot(x2, wih_m_ref[...],
                      preferred_element_type=jnp.float32) + bih_m_ref[...]   # (T*B, 3P)
    xproj_b = jnp.dot(x2, wih_b_ref[...],
                      preferred_element_type=jnp.float32) + bih_b_ref[...]   # (T*B, 3Hd)

    h_m = h0m_ref[...]
    h_b = h0b_ref[...]

    # Static unroll over time: gives the scheduler full cross-step visibility and
    # makes every slice / store statically indexed.
    # TODO(synk): on v7x the two independent GRU chains could be split across the
    # two TensorCores (core_map); kept single-core here for v5e/v6e portability.
    for t in range(T):
        lo = t * B
        h_m = _gru_step(h_m, xproj_m[lo:lo + B], whh_m, bhh_m, P)     # (B, P)
        h_b = _gru_step(h_b, xproj_b[lo:lo + B], whh_b, bhh_b, Hd)    # (B, Hd)

        # restrict_parameter_ranges: exp(-x) for positive-only params, 0 for the
        # others (matches the reference's torch.zeros + selective fill), then the
        # mean over the batch -> per-step "global" distribution parameters.
        # NOTE: the batch mean ignores `lengths` (all sequences are full length T
        # in this synthetic setup).
        g_t = jnp.mean(jnp.exp(-h_m) * mask, axis=0, keepdims=True)   # (1, P)

        # BasicModelOneTheta head: a single matmul against [wp | wc] produces both
        # individualized params and next-step covariate predictions.
        head_t = jnp.dot(h_b, w_head,
                         preferred_element_type=jnp.float32) + b_head  # (B, P+D)
        ind_t = jnp.exp(-head_t[:, :P]) * mask                         # (B, P)

        # Lane-range stores in (B, T*P)/(B, (T-1)*D) layout; the wrapper reshape
        # back to (B, T, P)/(B, T-1, D) is a free row-major reshape.
        combined_ref[:, t * P:(t + 1) * P] = g_t + ind_t
        if t < T - 1:
            cov_ref[:, t * D:(t + 1) * D] = head_t[:, P:]


def global_plus_eps_forward(x, lengths, weights, pos_mask):
    """x: (T, B, covariate_dim+1). Returns (next_step_cov_preds, combined, lengths)."""
    T, B, Din = x.shape
    P = weights['h0_main'].shape[-1]
    Hd = weights['h0_basic'].shape[-1]
    D = weights['wc'].shape[-1]

    x2 = x.reshape(T * B, Din)                                        # free reshape
    w_head = jnp.concatenate([weights['wp'], weights['wc']], axis=1)  # (Hd, P+D)
    b_head = jnp.concatenate([weights['bp'], weights['bc']]).reshape(1, P + D)
    mask = pos_mask.reshape(1, P)

    wih_m, whh_m, bih_m, bhh_m = weights['gru_main']
    wih_b, whh_b, bih_b, bhh_b = weights['gru_basic']

    cov_flat, combined_flat = pl.pallas_call(
        _fused_forward_kernel,
        out_shape=(jax.ShapeDtypeStruct((B, (T - 1) * D), jnp.float32),
                   jax.ShapeDtypeStruct((B, T * P), jnp.float32)),
        in_specs=[_vmem()] * 14,
        out_specs=(_vmem(), _vmem()),
    )(x2, weights['h0_main'], weights['h0_basic'],
      wih_m, whh_m, bih_m, bhh_m,
      wih_b, whh_b, bih_b, bhh_b,
      w_head, b_head, mask)

    next_step_cov_preds = cov_flat.reshape(B, T - 1, D)               # (B, T-1, Din)
    combined = combined_flat.reshape(B, T, P)                         # (B, T, P)
    return next_step_cov_preds, combined, lengths


def init_gru_params(key, input_dim, hidden):
    # PyTorch nn.GRU init U(-1/sqrt(H), 1/sqrt(H)); weights stored pre-transposed
    # and gate-concatenated (r, z, n): wih (in, 3H), whh (H, 3H), biases (1, 3H).
    k = 1.0 / float(hidden) ** 0.5
    ks = jax.random.split(key, 4)
    wih = jax.random.uniform(ks[0], (input_dim, 3 * hidden), jnp.float32, -k, k)
    whh = jax.random.uniform(ks[1], (hidden, 3 * hidden), jnp.float32, -k, k)
    bih = jax.random.uniform(ks[2], (1, 3 * hidden), jnp.float32, -k, k)
    bhh = jax.random.uniform(ks[3], (1, 3 * hidden), jnp.float32, -k, k)
    return wih, whh, bih, bhh


if __name__ == "__main__":
    distribution_type = 'gamma'
    n_dist_params, pos_flags = SURVIVAL_DISTRIBUTION_CONFIGS[distribution_type]
    model_params = {'covariate_dim': 4, 'hidden_dim': 8, 'n_layers_rnn': None}

    T, B = 8, 4
    Din = model_params['covariate_dim'] + 1
    Hd = model_params['hidden_dim']

    key = jax.random.PRNGKey(0)
    (k_x, k_h0m, k_h0b, k_gm, k_gb,
     k_wp, k_bp, k_wc, k_bc) = jax.random.split(key, 9)

    x = jax.random.normal(k_x, (T, B, Din), jnp.float32)
    lengths = jnp.full((B,), T, jnp.int32)
    pos_mask = jnp.array(pos_flags, jnp.float32)

    weights = {
        # Main GRU: (covariate_dim + 1) -> n_distribution_params
        'gru_main': init_gru_params(k_gm, Din, n_dist_params),
        # h_0 is torch.randn in the reference; made deterministic here.
        'h0_main': jax.random.normal(k_h0m, (B, n_dist_params), jnp.float32),
        # TODO(synk): BasicModelOneTheta source not provided; approximated as a GRU
        # (hidden_dim) encoder + linear heads for next-step covariates and
        # individualized range-restricted distribution parameters.
        'gru_basic': init_gru_params(k_gb, Din, Hd),
        'h0_basic': jax.random.normal(k_h0b, (B, Hd), jnp.float32),
        'wp': jax.random.uniform(k_wp, (Hd, n_dist_params), jnp.float32, -0.5, 0.5),
        'bp': jax.random.uniform(k_bp, (n_dist_params,), jnp.float32, -0.5, 0.5),
        'wc': jax.random.uniform(k_wc, (Hd, Din), jnp.float32, -0.5, 0.5),
        'bc': jax.random.uniform(k_bc, (Din,), jnp.float32, -0.5, 0.5),
    }

    fwd = jax.jit(global_plus_eps_forward)
    out = fwd(x, lengths, weights, pos_mask)
    out = jax.block_until_ready(out)
    assert out[0].shape == (B, T - 1, Din)
    assert out[1].shape == (B, T, n_dist_params)
    print("KERNEL_OK")
</pallas_src>

<mosaic_0001>
module attributes {stable_mosaic.version = 11 : i64} {
  func.func @_fused_forward_kernel(%arg0: memref<32x5xf32, #tpu.memory_space<vmem>>, %arg1: memref<4x2xf32, #tpu.memory_space<vmem>>, %arg2: memref<4x8xf32, #tpu.memory_space<vmem>>, %arg3: memref<5x6xf32, #tpu.memory_space<vmem>>, %arg4: memref<2x6xf32, #tpu.memory_space<vmem>>, %arg5: memref<1x6xf32, #tpu.memory_space<vmem>>, %arg6: memref<1x6xf32, #tpu.memory_space<vmem>>, %arg7: memref<5x24xf32, #tpu.memory_space<vmem>>, %arg8: memref<8x24xf32, #tpu.memory_space<vmem>>, %arg9: memref<1x24xf32, #tpu.memory_space<vmem>>, %arg10: memref<1x24xf32, #tpu.memory_space<vmem>>, %arg11: memref<8x7xf32, #tpu.memory_space<vmem>>, %arg12: memref<1x7xf32, #tpu.memory_space<vmem>>, %arg13: memref<1x2xf32, #tpu.memory_space<vmem>>, %arg14: memref<4x35xf32, #tpu.memory_space<vmem>>, %arg15: memref<4x16xf32, #tpu.memory_space<vmem>>) attributes {dimension_semantics = [], scalar_prefetch = 0 : i64, scratch_operands = 0 : i64, tpu.core_type = #tpu.core_type<tc>} {
    %c0 = arith.constant 0 : index
    %c0_0 = arith.constant 0 : index
    %0 = vector.load %arg4[%c0, %c0_0] : memref<2x6xf32, #tpu.memory_space<vmem>>, vector<2x6xf32>
    %c0_1 = arith.constant 0 : index
    %c0_2 = arith.constant 0 : index
    %1 = vector.load %arg6[%c0_1, %c0_2] : memref<1x6xf32, #tpu.memory_space<vmem>>, vector<1x6xf32>
    %c0_3 = arith.constant 0 : index
    %c0_4 = arith.constant 0 : index
    %2 = vector.load %arg8[%c0_3, %c0_4] : memref<8x24xf32, #tpu.memory_space<vmem>>, vector<8x24xf32>
    %c0_5 = arith.constant 0 : index
    %c0_6 = arith.constant 0 : index
    %3 = vector.load %arg10[%c0_5, %c0_6] : memref<1x24xf32, #tpu.memory_space<vmem>>, vector<1x24xf32>
    %c0_7 = arith.constant 0 : index
    %c0_8 = arith.constant 0 : index
    %4 = vector.load %arg11[%c0_7, %c0_8] : memref<8x7xf32, #tpu.memory_space<vmem>>, vector<8x7xf32>
    %c0_9 = arith.constant 0 : index
    %c0_10 = arith.constant 0 : index
    %5 = vector.load %arg12[%c0_9, %c0_10] : memref<1x7xf32, #tpu.memory_space<vmem>>, vector<1x7xf32>
    %c0_11 = arith.constant 0 : index
    %c0_12 = arith.constant 0 : index
    %6 = vector.load %arg13[%c0_11, %c0_12] : memref<1x2xf32, #tpu.memory_space<vmem>>, vector<1x2xf32>
    %c0_13 = arith.constant 0 : index
    %c0_14 = arith.constant 0 : index
    %7 = vector.load %arg0[%c0_13, %c0_14] : memref<32x5xf32, #tpu.memory_space<vmem>>, vector<32x5xf32>
    %c0_15 = arith.constant 0 : index
    %c0_16 = arith.constant 0 : index
    %8 = vector.load %arg3[%c0_15, %c0_16] : memref<5x6xf32, #tpu.memory_space<vmem>>, vector<5x6xf32>
    %cst = arith.constant dense<0.000000e+00> : vector<32x6xf32>
    %9 = tpu.matmul %7, %8, %cst {dimension_numbers = #tpu.dot_dimension_numbers<[1], [0], [0], [1], [0, 0, 1, 1], [], []>} : vector<32x5xf32>, vector<5x6xf32>, vector<32x6xf32> -> vector<32x6xf32>
    %c0_17 = arith.constant 0 : index
    %c0_18 = arith.constant 0 : index
    %10 = vector.load %arg5[%c0_17, %c0_18] : memref<1x6xf32, #tpu.memory_space<vmem>>, vector<1x6xf32>
    %11 = vector.broadcast %10 : vector<1x6xf32> to vector<32x6xf32>
    %12 = arith.addf %9, %11 : vector<32x6xf32>
    %c0_19 = arith.constant 0 : index
    %c0_20 = arith.constant 0 : index
    %13 = vector.load %arg7[%c0_19, %c0_20] : memref<5x24xf32, #tpu.memory_space<vmem>>, vector<5x24xf32>
    %cst_21 = arith.constant dense<0.000000e+00> : vector<32x24xf32>
    %14 = tpu.matmul %7, %13, %cst_21 {dimension_numbers = #tpu.dot_dimension_numbers<[1], [0], [0], [1], [0, 0, 1, 1], [], []>} : vector<32x5xf32>, vector<5x24xf32>, vector<32x24xf32> -> vector<32x24xf32>
    %c0_22 = arith.constant 0 : index
    %c0_23 = arith.constant 0 : index
    %15 = vector.load %arg9[%c0_22, %c0_23] : memref<1x24xf32, #tpu.memory_space<vmem>>, vector<1x24xf32>
    %16 = vector.broadcast %15 : vector<1x24xf32> to vector<32x24xf32>
    %17 = arith.addf %14, %16 : vector<32x24xf32>
    %c0_24 = arith.constant 0 : index
    %c0_25 = arith.constant 0 : index
    %18 = vector.load %arg1[%c0_24, %c0_25] : memref<4x2xf32, #tpu.memory_space<vmem>>, vector<4x2xf32>
    %c0_26 = arith.constant 0 : index
    %c0_27 = arith.constant 0 : index
    %19 = vector.load %arg2[%c0_26, %c0_27] : memref<4x8xf32, #tpu.memory_space<vmem>>, vector<4x8xf32>
    %20 = vector.extract_strided_slice %12 {offsets = [0, 0], sizes = [4, 6], strides = [1, 1]} : vector<32x6xf32> to vector<4x6xf32>
    %cst_28 = arith.constant dense<0.000000e+00> : vector<4x6xf32>
    %21 = tpu.matmul %18, %0, %cst_28 {dimension_numbers = #tpu.dot_dimension_numbers<[1], [0], [0], [1], [0, 0, 1, 1], [], []>} : vector<4x2xf32>, vector<2x6xf32>, vector<4x6xf32> -> vector<4x6xf32>
    %22 = vector.broadcast %1 : vector<1x6xf32> to vector<4x6xf32>
    %23 = arith.addf %21, %22 : vector<4x6xf32>
    %24 = vector.extract_strided_slice %20 {offsets = [0, 0], sizes = [4, 2], strides = [1, 1]} : vector<4x6xf32> to vector<4x2xf32>
    %25 = vector.extract_strided_slice %23 {offsets = [0, 0], sizes = [4, 2], strides = [1, 1]} : vector<4x6xf32> to vector<4x2xf32>
    %26 = arith.addf %24, %25 : vector<4x2xf32>
    %27 = arith.negf %26 : vector<4x2xf32>
    %28 = math.exp %27 : vector<4x2xf32>
    %cst_29 = arith.constant 1.000000e+00 : f32
    %29 = vector.broadcast %cst_29 : f32 to vector<4x2xf32>
    %30 = arith.addf %29, %28 : vector<4x2xf32>
    %31 = arith.divf %29, %30 : vector<4x2xf32>
    %32 = vector.extract_strided_slice %20 {offsets = [0, 2], sizes = [4, 2], strides = [1, 1]} : vector<4x6xf32> to vector<4x2xf32>
    %33 = vector.extract_strided_slice %23 {offsets = [0, 2], sizes = [4, 2], strides = [1, 1]} : vector<4x6xf32> to vector<4x2xf32>
    %34 = arith.addf %32, %33 : vector<4x2xf32>
    %35 = arith.negf %34 : vector<4x2xf32>
    %36 = math.exp %35 : vector<4x2xf32>
    %cst_30 = arith.constant 1.000000e+00 : f32
    %37 = vector.broadcast %cst_30 : f32 to vector<4x2xf32>
    %38 = arith.addf %37, %36 : vector<4x2xf32>
    %39 = arith.divf %37, %38 : vector<4x2xf32>
    %40 = vector.extract_strided_slice %20 {offsets = [0, 4], sizes = [4, 2], strides = [1, 1]} : vector<4x6xf32> to vector<4x2xf32>
    %41 = vector.extract_strided_slice %23 {offsets = [0, 4], sizes = [4, 2], strides = [1, 1]} : vector<4x6xf32> to vector<4x2xf32>
    %42 = arith.mulf %31, %41 : vector<4x2xf32>
    %43 = arith.addf %40, %42 : vector<4x2xf32>
    %44 = math.tanh %43 : vector<4x2xf32>
    %cst_31 = arith.constant 1.000000e+00 : f32
    %45 = vector.broadcast %cst_31 : f32 to vector<4x2xf32>
    %46 = arith.subf %45, %39 : vector<4x2xf32>
    %47 = arith.mulf %46, %44 : vector<4x2xf32>
    %48 = arith.mulf %39, %18 : vector<4x2xf32>
    %49 = arith.addf %47, %48 : vector<4x2xf32>
    %50 = vector.extract_strided_slice %17 {offsets = [0, 0], sizes = [4, 24], strides = [1, 1]} : vector<32x24xf32> to vector<4x24xf32>
    %cst_32 = arith.constant dense<0.000000e+00> : vector<4x24xf32>
    %51 = tpu.matmul %19, %2, %cst_32 {dimension_numbers = #tpu.dot_dimension_numbers<[1], [0], [0], [1], [0, 0, 1, 1], [], []>} : vector<4x8xf32>, vector<8x24xf32>, vector<4x24xf32> -> vector<4x24xf32>
    %52 = vector.broadcast %3 : vector<1x24xf32> to vector<4x24xf32>
    %53 = arith.addf %51, %52 : vector<4x24xf32>
    %54 = vector.extract_strided_slice %50 {offsets = [0, 0], sizes = [4, 8], strides = [1, 1]} : vector<4x24xf32> to vector<4x8xf32>
    %55 = vector.extract_strided_slice %53 {offsets = [0, 0], sizes = [4, 8], strides = [1, 1]} : vector<4x24xf32> to vector<4x8xf32>
    %56 = arith.addf %54, %55 : vector<4x8xf32>
    %57 = arith.negf %56 : vector<4x8xf32>
    %58 = math.exp %57 : vector<4x8xf32>
    %cst_33 = arith.constant 1.000000e+00 : f32
    %59 = vector.broadcast %cst_33 : f32 to vector<4x8xf32>
    %60 = arith.addf %59, %58 : vector<4x8xf32>
    %61 = arith.divf %59, %60 : vector<4x8xf32>
    %62 = vector.extract_strided_slice %50 {offsets = [0, 8], sizes = [4, 8], strides = [1, 1]} : vector<4x24xf32> to vector<4x8xf32>
    %63 = vector.extract_strided_slice %53 {offsets = [0, 8], sizes = [4, 8], strides = [1, 1]} : vector<4x24xf32> to vector<4x8xf32>
    %64 = arith.addf %62, %63 : vector<4x8xf32>
    %65 = arith.negf %64 : vector<4x8xf32>
    %66 = math.exp %65 : vector<4x8xf32>
    %cst_34 = arith.constant 1.000000e+00 : f32
    %67 = vector.broadcast %cst_34 : f32 to vector<4x8xf32>
    %68 = arith.addf %67, %66 : vector<4x8xf32>
    %69 = arith.divf %67, %68 : vector<4x8xf32>
    %70 = vector.extract_strided_slice %50 {offsets = [0, 16], sizes = [4, 8], strides = [1, 1]} : vector<4x24xf32> to vector<4x8xf32>
    %71 = vector.extract_strided_slice %53 {offsets = [0, 16], sizes = [4, 8], strides = [1, 1]} : vector<4x24xf32> to vector<4x8xf32>
    %72 = arith.mulf %61, %71 : vector<4x8xf32>
    %73 = arith.addf %70, %72 : vector<4x8xf32>
    %74 = math.tanh %73 : vector<4x8xf32>
    %cst_35 = arith.constant 1.000000e+00 : f32
    %75 = vector.broadcast %cst_35 : f32 to vector<4x8xf32>
    %76 = arith.subf %75, %69 : vector<4x8xf32>
    %77 = arith.mulf %76, %74 : vector<4x8xf32>
    %78 = arith.mulf %69, %19 : vector<4x8xf32>
    %79 = arith.addf %77, %78 : vector<4x8xf32>
    %cst_36 = arith.constant 0.000000e+00 : f32
    %80 = vector.broadcast %cst_36 : f32 to vector<4x2xf32>
    %81 = arith.subf %80, %49 : vector<4x2xf32>
    %82 = math.exp %81 : vector<4x2xf32>
    %83 = vector.broadcast %6 : vector<1x2xf32> to vector<4x2xf32>
    %84 = arith.mulf %82, %83 : vector<4x2xf32>
    %cst_37 = arith.constant dense<0.000000e+00> : vector<2xf32>
    %85 = vector.multi_reduction <add>, %84, %cst_37 [0] : vector<4x2xf32> to vector<2xf32>
    %86 = vector.shape_cast %85 : vector<2xf32> to vector<1x2xf32>
    %cst_38 = arith.constant 4.000000e+00 : f32
    %87 = vector.broadcast %cst_38 : f32 to vector<1x2xf32>
    %88 = arith.divf %86, %87 : vector<1x2xf32>
    %cst_39 = arith.constant dense<0.000000e+00> : vector<4x7xf32>
    %89 = tpu.matmul %79, %4, %cst_39 {dimension_numbers = #tpu.dot_dimension_numbers<[1], [0], [0], [1], [0, 0, 1, 1], [], []>} : vector<4x8xf32>, vector<8x7xf32>, vector<4x7xf32> -> vector<4x7xf32>
    %90 = vector.broadcast %5 : vector<1x7xf32> to vector<4x7xf32>
    %91 = arith.addf %89, %90 : vector<4x7xf32>
    %92 = vector.extract_strided_slice %91 {offsets = [0, 0], sizes = [4, 2], strides = [1, 1]} : vector<4x7xf32> to vector<4x2xf32>
    %cst_40 = arith.constant 0.000000e+00 : f32
    %93 = vector.broadcast %cst_40 : f32 to vector<4x2xf32>
    %94 = arith.subf %93, %92 : vector<4x2xf32>
    %95 = math.exp %94 : vector<4x2xf32>
    %96 = vector.broadcast %6 : vector<1x2xf32> to vector<4x2xf32>
    %97 = arith.mulf %95, %96 : vector<4x2xf32>
    %98 = vector.broadcast %88 : vector<1x2xf32> to vector<4x2xf32>
    %99 = arith.addf %98, %97 : vector<4x2xf32>
    %c0_41 = arith.constant 0 : index
    %c0_42 = arith.constant 0 : index
    %100 = vector.load %arg15[%c0_41, %c0_42] : memref<4x16xf32, #tpu.memory_space<vmem>>, vector<4x2xf32>
    tpu.vector_store %arg15[%c0_41, %c0_42], %99 {strides = array<i32>} : memref<4x16xf32, #tpu.memory_space<vmem>>, vector<4x2xf32>,
    %101 = vector.extract_strided_slice %91 {offsets = [0, 2], sizes = [4, 5], strides = [1, 1]} : vector<4x7xf32> to vector<4x5xf32>
    %c0_43 = arith.constant 0 : index
    %c0_44 = arith.constant 0 : index
    %102 = vector.load %arg14[%c0_43, %c0_44] : memref<4x35xf32, #tpu.memory_space<vmem>>, vector<4x5xf32>
    tpu.vector_store %arg14[%c0_43, %c0_44], %101 {strides = array<i32>} : memref<4x35xf32, #tpu.memory_space<vmem>>, vector<4x5xf32>,
    %103 = vector.extract_strided_slice %12 {offsets = [4, 0], sizes = [4, 6], strides = [1, 1]} : vector<32x6xf32> to vector<4x6xf32>
    %cst_45 = arith.constant dense<0.000000e+00> : vector<4x6xf32>
    %104 = tpu.matmul %49, %0, %cst_45 {dimension_numbers = #tpu.dot_dimension_numbers<[1], [0], [0], [1], [0, 0, 1, 1], [], []>} : vector<4x2xf32>, vector<2x6xf32>, vector<4x6xf32> -> vector<4x6xf32>
    %105 = vector.broadcast %1 : vector<1x6xf32> to vector<4x6xf32>
    %106 = arith.addf %104, %105 : vector<4x6xf32>
    %107 = vector.extract_strided_slice %103 {offsets = [0, 0], sizes = [4, 2], strides = [1, 1]} : vector<4x6xf32> to vector<4x2xf32>
    %108 = vector.extract_strided_slice %106 {offsets = [0, 0], sizes = [4, 2], strides = [1, 1]} : vector<4x6xf32> to vector<4x2xf32>
    %109 = arith.addf %107, %108 : vector<4x2xf32>
    %110 = arith.negf %109 : vector<4x2xf32>
    %111 = math.exp %110 : vector<4x2xf32>
    %cst_46 = arith.constant 1.000000e+00 : f32
    %112 = vector.broadcast %cst_46 : f32 to vector<4x2xf32>
    %113 = arith.addf %112, %111 : vector<4x2xf32>
    %114 = arith.divf %112, %113 : vector<4x2xf32>
    %115 = vector.extract_strided_slice %103 {offsets = [0, 2], sizes = [4, 2], strides = [1, 1]} : vector<4x6xf32> to vector<4x2xf32>
    %116 = vector.extract_strided_slice %106 {offsets = [0, 2], sizes = [4, 2], strides = [1, 1]} : vector<4x6xf32> to vector<4x2xf32>
    %117 = arith.addf %115, %116 : vector<4x2xf32>
    %118 = arith.negf %117 : vector<4x2xf32>
    %119 = math.exp %118 : vector<4x2xf32>
    %cst_47 = arith.constant 1.000000e+00 : f32
    %120 = vector.broadcast %cst_47 : f32 to vector<4x2xf32>
    %121 = arith.addf %120, %119 : vector<4x2xf32>
    %122 = arith.divf %120, %121 : vector<4x2xf32>
    %123 = vector.extract_strided_slice %103 {offsets = [0, 4], sizes = [4, 2], strides = [1, 1]} : vector<4x6xf32> to vector<4x2xf32>
    %124 = vector.extract_strided_slice %106 {offsets = [0, 4], sizes = [4, 2], strides = [1, 1]} : vector<4x6xf32> to vector<4x2xf32>
    %125 = arith.mulf %114, %124 : vector<4x2xf32>
    %126 = arith.addf %123, %125 : vector<4x2xf32>
    %127 = math.tanh %126 : vector<4x2xf32>
    %cst_48 = arith.constant 1.000000e+00 : f32
    %128 = vector.broadcast %cst_48 : f32 to vector<4x2xf32>
    %129 = arith.subf %128, %122 : vector<4x2xf32>
    %130 = arith.mulf %129, %127 : vector<4x2xf32>
    %131 = arith.mulf %122, %49 : vector<4x2xf32>
    %132 = arith.addf %130, %131 : vector<4x2xf32>
    %133 = vector.extract_strided_slice %17 {offsets = [4, 0], sizes = [4, 24], strides = [1, 1]} : vector<32x24xf32> to vector<4x24xf32>
    %cst_49 = arith.constant dense<0.000000e+00> : vector<4x24xf32>
    %134 = tpu.matmul %79, %2, %cst_49 {dimension_numbers = #tpu.dot_dimension_numbers<[1], [0], [0], [1], [0, 0, 1, 1], [], []>} : vector<4x8xf32>, vector<8x24xf32>, vector<4x24xf32> -> vector<4x24xf32>
    %135 = vector.broadcast %3 : vector<1x24xf32> to vector<4x24xf32>
    %136 = arith.addf %134, %135 : vector<4x24xf32>
    %137 = vector.extract_strided_slice %133 {offsets = [0, 0], sizes = [4, 8], strides = [1, 1]} : vector<4x24xf32> to vector<4x8xf32>
    %138 = vector.extract_strided_slice %136 {offsets = [0, 0], sizes = [4, 8], strides = [1, 1]} : vector<4x24xf32> to vector<4x8xf32>
    %139 = arith.addf %137, %138 : vector<4x8xf32>
    %140 = arith.negf %139 : vector<4x8xf32>
    %141 = math.exp %140 : vector<4x8xf32>
    %cst_50 = arith.constant 1.000000e+00 : f32
    %142 = vector.broadcast %cst_50 : f32 to vector<4x8xf32>
    %143 = arith.addf %142, %141 : vector<4x8xf32>
    %144 = arith.divf %142, %143 : vector<4x8xf32>
    %145 = vector.extract_strided_slice %133 {offsets = [0, 8], sizes = [4, 8], strides = [1, 1]} : vector<4x24xf32> to vector<4x8xf32>
    %146 = vector.extract_strided_slice %136 {offsets = [0, 8], sizes = [4, 8], strides = [1, 1]} : vector<4x24xf32> to vector<4x8xf32>
    %147 = arith.addf %145, %146 : vector<4x8xf32>
    %148 = arith.negf %147 : vector<4x8xf32>
    %149 = math.exp %148 : vector<4x8xf32>
    %cst_51 = arith.constant 1.000000e+00 : f32
    %150 = vector.broadcast %cst_51 : f32 to vector<4x8xf32>
    %151 = arith.addf %150, %149 : vector<4x8xf32>
    %152 = arith.divf %150, %151 : vector<4x8xf32>
    %153 = vector.extract_strided_slice %133 {offsets = [0, 16], sizes = [4, 8], strides = [1, 1]} : vector<4x24xf32> to vector<4x8xf32>
    %154 = vector.extract_strided_slice %136 {offsets = [0, 16], sizes = [4, 8], strides = [1, 1]} : vector<4x24xf32> to vector<4x8xf32>
    %155 = arith.mulf %144, %154 : vector<4x8xf32>
    %156 = arith.addf %153, %155 : vector<4x8xf32>
    %157 = math.tanh %156 : vector<4x8xf32>
    %cst_52 = arith.constant 1.000000e+00 : f32
    %158 = vector.broadcast %cst_52 : f32 to vector<4x8xf32>
    %159 = arith.subf %158, %152 : vector<4x8xf32>
    %160 = arith.mulf %159, %157 : vector<4x8xf32>
    %161 = arith.mulf %152, %79 : vector<4x8xf32>
    %162 = arith.addf %160, %161 : vector<4x8xf32>
    %cst_53 = arith.constant 0.000000e+00 : f32
    %163 = vector.broadcast %cst_53 : f32 to vector<4x2xf32>
    %164 = arith.subf %163, %132 : vector<4x2xf32>
    %165 = math.exp %164 : vector<4x2xf32>
    %166 = vector.broadcast %6 : vector<1x2xf32> to vector<4x2xf32>
    %167 = arith.mulf %165, %166 : vector<4x2xf32>
    %cst_54 = arith.constant dense<0.000000e+00> : vector<2xf32>
    %168 = vector.multi_reduction <add>, %167, %cst_54 [0] : vector<4x2xf32> to vector<2xf32>
    %169 = vector.shape_cast %168 : vector<2xf32> to vector<1x2xf32>
    %cst_55 = arith.constant 4.000000e+00 : f32
    %170 = vector.broadcast %cst_55 : f32 to vector<1x2xf32>
    %171 = arith.divf %169, %170 : vector<1x2xf32>
    %cst_56 = arith.constant dense<0.000000e+00> : vector<4x7xf32>
    %172 = tpu.matmul %162, %4, %cst_56 {dimension_numbers = #tpu.dot_dimension_numbers<[1], [0], [0], [1], [0, 0, 1, 1], [], []>} : vector<4x8xf32>, vector<8x7xf32>, vector<4x7xf32> -> vector<4x7xf32>
    %173 = vector.broadcast %5 : vector<1x7xf32> to vector<4x7xf32>
    %174 = arith.addf %172, %173 : vector<4x7xf32>
    %175 = vector.extract_strided_slice %174 {offsets = [0, 0], sizes = [4, 2], strides = [1, 1]} : vector<4x7xf32> to vector<4x2xf32>
    %cst_57 = arith.constant 0.000000e+00 : f32
    %176 = vector.broadcast %cst_57 : f32 to vector<4x2xf32>
    %177 = arith.subf %176, %175 : vector<4x2xf32>
    %178 = math.exp %177 : vector<4x2xf32>
    %179 = vector.broadcast %6 : vector<1x2xf32> to vector<4x2xf32>
    %180 = arith.mulf %178, %179 : vector<4x2xf32>
    %181 = vector.broadcast %171 : vector<1x2xf32> to vector<4x2xf32>
    %182 = arith.addf %181, %180 : vector<4x2xf32>
    %c0_58 = arith.constant 0 : index
    %c2 = arith.constant 2 : index
    %183 = vector.load %arg15[%c0_58, %c2] : memref<4x16xf32, #tpu.memory_space<vmem>>, vector<4x2xf32>
    tpu.vector_store %arg15[%c0_58, %c2], %182 {strides = array<i32>} : memref<4x16xf32, #tpu.memory_space<vmem>>, vector<4x2xf32>,
    %184 = vector.extract_strided_slice %174 {offsets = [0, 2], sizes = [4, 5], strides = [1, 1]} : vector<4x7xf32> to vector<4x5xf32>
    %c0_59 = arith.constant 0 : index
    %c5 = arith.constant 5 : index
    %185 = vector.load %arg14[%c0_59, %c5] : memref<4x35xf32, #tpu.memory_space<vmem>>, vector<4x5xf32>
    tpu.vector_store %arg14[%c0_59, %c5], %184 {strides = array<i32>} : memref<4x35xf32, #tpu.memory_space<vmem>>, vector<4x5xf32>,
    %186 = vector.extract_strided_slice %12 {offsets = [8, 0], sizes = [4, 6], strides = [1, 1]} : vector<32x6xf32> to vector<4x6xf32>
    %cst_60 = arith.constant dense<0.000000e+00> : vector<4x6xf32>
    %187 = tpu.matmul %132, %0, %cst_60 {dimension_numbers = #tpu.dot_dimension_numbers<[1], [0], [0], [1], [0, 0, 1, 1], [], []>} : vector<4x2xf32>, vector<2x6xf32>, vector<4x6xf32> -> vector<4x6xf32>
    %188 = vector.broadcast %1 : vector<1x6xf32> to vector<4x6xf32>
    %189 = arith.addf %187, %188 : vector<4x6xf32>
    %190 = vector.extract_strided_slice %186 {offsets = [0, 0], sizes = [4, 2], strides = [1, 1]} : vector<4x6xf32> to vector<4x2xf32>
    %191 = vector.extract_strided_slice %189 {offsets = [0, 0], sizes = [4, 2], strides = [1, 1]} : vector<4x6xf32> to vector<4x2xf32>
    %192 = arith.addf %190, %191 : vector<4x2xf32>
    %193 = arith.negf %192 : vector<4x2xf32>
    %194 = math.exp %193 : vector<4x2xf32>
    %cst_61 = arith.constant 1.000000e+00 : f32
    %195 = vector.broadcast %cst_61 : f32 to vector<4x2xf32>
    %196 = arith.addf %195, %194 : vector<4x2xf32>
    %197 = arith.divf %195, %196 : vector<4x2xf32>
    %198 = vector.extract_strided_slice %186 {offsets = [0, 2], sizes = [4, 2], strides = [1, 1]} : vector<4x6xf32> to vector<4x2xf32>
    %199 = vector.extract_strided_slice %189 {offsets = [0, 2], sizes = [4, 2], strides = [1, 1]} : vector<4x6xf32> to vector<4x2xf32>
    %200 = arith.addf %198, %199 : vector<4x2xf32>
    %201 = arith.negf %200 : vector<4x2xf32>
    %202 = math.exp %201 : vector<4x2xf32>
    %cst_62 = arith.constant 1.000000e+00 : f32
    %203 = vector.broadcast %cst_62 : f32 to vector<4x2xf32>
    %204 = arith.addf %203, %202 : vector<4x2xf32>
    %205 = arith.divf %203, %204 : vector<4x2xf32>
    %206 = vector.extract_strided_slice %186 {offsets = [0, 4], sizes = [4, 2], strides = [1, 1]} : vector<4x6xf32> to vector<4x2xf32>
    %207 = vector.extract_strided_slice %189 {offsets = [0, 4], sizes = [4, 2], strides = [1, 1]} : vector<4x6xf32> to vector<4x2xf32>
    %208 = arith.mulf %197, %207 : vector<4x2xf32>
    %209 = arith.addf %206, %208 : vector<4x2xf32>
    %210 = math.tanh %209 : vector<4x2xf32>
    %cst_63 = arith.constant 1.000000e+00 : f32
    %211 = vector.broadcast %cst_63 : f32 to vector<4x2xf32>
    %212 = arith.subf %211, %205 : vector<4x2xf32>
    %213 = arith.mulf %212, %210 : vector<4x2xf32>
    %214 = arith.mulf %205, %132 : vector<4x2xf32>
    %215 = arith.addf %213, %214 : vector<4x2xf32>
    %216 = vector.extract_strided_slice %17 {offsets = [8, 0], sizes = [4, 24], strides = [1, 1]} : vector<32x24xf32> to vector<4x24xf32>
    %cst_64 = arith.constant dense<0.000000e+00> : vector<4x24xf32>
    %217 = tpu.matmul %162, %2, %cst_64 {dimension_numbers = #tpu.dot_dimension_numbers<[1], [0], [0], [1], [0, 0, 1, 1], [], []>} : vector<4x8xf32>, vector<8x24xf32>, vector<4x24xf32> -> vector<4x24xf32>
    %218 = vector.broadcast %3 : vector<1x24xf32> to vector<4x24xf32>
    %219 = arith.addf %217, %218 : vector<4x24xf32>
    %220 = vector.extract_strided_slice %216 {offsets = [0, 0], sizes = [4, 8], strides = [1, 1]} : vector<4x24xf32> to vector<4x8xf32>
    %221 = vector.extract_strided_slice %219 {offsets = [0, 0], sizes = [4, 8], strides = [1, 1]} : vector<4x24xf32> to vector<4x8xf32>
    %222 = arith.addf %220, %221 : vector<4x8xf32>
    %223 = arith.negf %222 : vector<4x8xf32>
    %224 = math.exp %223 : vector<4x8xf32>
    %cst_65 = arith.constant 1.000000e+00 : f32
    %225 = vector.broadcast %cst_65 : f32 to vector<4x8xf32>
    %226 = arith.addf %225, %224 : vector<4x8xf32>
    %227 = arith.divf %225, %226 : vector<4x8xf32>
    %228 = vector.extract_strided_slice %216 {offsets = [0, 8], sizes = [4, 8], strides = [1, 1]} : vector<4x24xf32> to vector<4x8xf32>
    %229 = vector.extract_strided_slice %219 {offsets = [0, 8], sizes = [4, 8], strides = [1, 1]} : vector<4x24xf32> to vector<4x8xf32>
    %230 = arith.addf %228, %229 : vector<4x8xf32>
    %231 = arith.negf %230 : vector<4x8xf32>
    %232 = math.exp %231 : vector<4x8xf32>
    %cst_66 = arith.constant 1.000000e+00 : f32
    %233 = vector.broadcast %cst_66 : f32 to vector<4x8xf32>
    %234 = arith.addf %233, %232 : vector<4x8xf32>
    %235 = arith.divf %233, %234 : vector<4x8xf32>
    %236 = vector.extract_strided_slice %216 {offsets = [0, 16], sizes = [4, 8], strides = [1, 1]} : vector<4x24xf32> to vector<4x8xf32>
    %237 = vector.extract_strided_slice %219 {offsets = [0, 16], sizes = [4, 8], strides = [1, 1]} : vector<4x24xf32> to vector<4x8xf32>
    %238 = arith.mulf %227, %237 : vector<4x8xf32>
    %239 = arith.addf %236, %238 : vector<4x8xf32>
    %240 = math.tanh %239 : vector<4x8xf32>
    %cst_67 = arith.constant 1.000000e+00 : f32
    %241 = vector.broadcast %cst_67 : f32 to vector<4x8xf32>
    %242 = arith.subf %241, %235 : vector<4x8xf32>
    %243 = arith.mulf %242, %240 : vector<4x8xf32>
    %244 = arith.mulf %235, %162 : vector<4x8xf32>
    %245 = arith.addf %243, %244 : vector<4x8xf32>
    %cst_68 = arith.constant 0.000000e+00 : f32
    %246 = vector.broadcast %cst_68 : f32 to vector<4x2xf32>
    %247 = arith.subf %246, %215 : vector<4x2xf32>
    %248 = math.exp %247 : vector<4x2xf32>
    %249 = vector.broadcast %6 : vector<1x2xf32> to vector<4x2xf32>
    %250 = arith.mulf %248, %249 : vector<4x2xf32>
    %cst_69 = arith.constant dense<0.000000e+00> : vector<2xf32>
    %251 = vector.multi_reduction <add>, %250, %cst_69 [0] : vector<4x2xf32> to vector<2xf32>
    %252 = vector.shape_cast %251 : vector<2xf32> to vector<1x2xf32>
    %cst_70 = arith.constant 4.000000e+00 : f32
    %253 = vector.broadcast %cst_70 : f32 to vector<1x2xf32>
    %254 = arith.divf %252, %253 : vector<1x2xf32>
    %cst_71 = arith.constant dense<0.000000e+00> : vector<4x7xf32>
    %255 = tpu.matmul %245, %4, %cst_71 {dimension_numbers = #tpu.dot_dimension_numbers<[1], [0], [0], [1], [0, 0, 1, 1], [], []>} : vector<4x8xf32>, vector<8x7xf32>, vector<4x7xf32> -> vector<4x7xf32>
    %256 = vector.broadcast %5 : vector<1x7xf32> to vector<4x7xf32>
    %257 = arith.addf %255, %256 : vector<4x7xf32>
    %258 = vector.extract_strided_slice %257 {offsets = [0, 0], sizes = [4, 2], strides = [1, 1]} : vector<4x7xf32> to vector<4x2xf32>
    %cst_72 = arith.constant 0.000000e+00 : f32
    %259 = vector.broadcast %cst_72 : f32 to vector<4x2xf32>
    %260 = arith.subf %259, %258 : vector<4x2xf32>
    %261 = math.exp %260 : vector<4x2xf32>
    %262 = vector.broadcast %6 : vector<1x2xf32> to vector<4x2xf32>
    %263 = arith.mulf %261, %262 : vector<4x2xf32>
    %264 = vector.broadcast %254 : vector<1x2xf32> to vector<4x2xf32>
    %265 = arith.addf %264, %263 : vector<4x2xf32>
    %c0_73 = arith.constant 0 : index
    %c4 = arith.constant 4 : index
    %266 = vector.load %arg15[%c0_73, %c4] : memref<4x16xf32, #tpu.memory_space<vmem>>, vector<4x2xf32>
    tpu.vector_store %arg15[%c0_73, %c4], %265 {strides = array<i32>} : memref<4x16xf32, #tpu.memory_space<vmem>>, vector<4x2xf32>,
    %267 = vector.extract_strided_slice %257 {offsets = [0, 2], sizes = [4, 5], strides = [1, 1]} : vector<4x7xf32> to vector<4x5xf32>
    %c0_74 = arith.constant 0 : index
    %c10 = arith.constant 10 : index
    %268 = vector.load %arg14[%c0_74, %c10] : memref<4x35xf32, #tpu.memory_space<vmem>>, vector<4x5xf32>
    tpu.vector_store %arg14[%c0_74, %c10], %267 {strides = array<i32>} : memref<4x35xf32, #tpu.memory_space<vmem>>, vector<4x5xf32>,
    %269 = vector.extract_strided_slice %12 {offsets = [12, 0], sizes = [4, 6], strides = [1, 1]} : vector<32x6xf32> to vector<4x6xf32>
    %cst_75 = arith.constant dense<0.000000e+00> : vector<4x6xf32>
    %270 = tpu.matmul %215, %0, %cst_75 {dimension_numbers = #tpu.dot_dimension_numbers<[1], [0], [0], [1], [0, 0, 1, 1], [], []>} : vector<4x2xf32>, vector<2x6xf32>, vector<4x6xf32> -> vector<4x6xf32>
    %271 = vector.broadcast %1 : vector<1x6xf32> to vector<4x6xf32>
    %272 = arith.addf %270, %271 : vector<4x6xf32>
    %273 = vector.extract_strided_slice %269 {offsets = [0, 0], sizes = [4, 2], strides = [1, 1]} : vector<4x6xf32> to vector<4x2xf32>
    %274 = vector.extract_strided_slice %272 {offsets = [0, 0], sizes = [4, 2], strides = [1, 1]} : vector<4x6xf32> to vector<4x2xf32>
    %275 = arith.addf %273, %274 : vector<4x2xf32>
    %276 = arith.negf %275 : vector<4x2xf32>
    %277 = math.exp %276 : vector<4x2xf32>
    %cst_76 = arith.constant 1.000000e+00 : f32
    %278 = vector.broadcast %cst_76 : f32 to vector<4x2xf32>
    %279 = arith.addf %278, %277 : vector<4x2xf32>
    %280 = arith.divf %278, %279 : vector<4x2xf32>
    %281 = vector.extract_strided_slice %269 {offsets = [0, 2], sizes = [4, 2], strides = [1, 1]} : vector<4x6xf32> to vector<4x2xf32>
    %282 = vector.extract_strided_slice %272 {offsets = [0, 2], sizes = [4, 2], strides = [1, 1]} : vector<4x6xf32> to vector<4x2xf32>
    %283 = arith.addf %281, %282 : vector<4x2xf32>
    %284 = arith.negf %283 : vector<4x2xf32>
    %285 = math.exp %284 : vector<4x2xf32>
    %cst_77 = arith.constant 1.000000e+00 : f32
    %286 = vector.broadcast %cst_77 : f32 to vector<4x2xf32>
    %287 = arith.addf %286, %285 : vector<4x2xf32>
    %288 = arith.divf %286, %287 : vector<4x2xf32>
    %289 = vector.extract_strided_slice %269 {offsets = [0, 4], sizes = [4, 2], strides = [1, 1]} : vector<4x6xf32> to vector<4x2xf32>
    %290 = vector.extract_strided_slice %272 {offsets = [0, 4], sizes = [4, 2], strides = [1, 1]} : vector<4x6xf32> to vector<4x2xf32>
    %291 = arith.mulf %280, %290 : vector<4x2xf32>
    %292 = arith.addf %289, %291 : vector<4x2xf32>
    %293 = math.tanh %292 : vector<4x2xf32>
    %cst_78 = arith.constant 1.000000e+00 : f32
    %294 = vector.broadcast %cst_78 : f32 to vector<4x2xf32>
    %295 = arith.subf %294, %288 : vector<4x2xf32>
    %296 = arith.mulf %295, %293 : vector<4x2xf32>
    %297 = arith.mulf %288, %215 : vector<4x2xf32>
    %298 = arith.addf %296, %297 : vector<4x2xf32>
    %299 = vector.extract_strided_slice %17 {offsets = [12, 0], sizes = [4, 24], strides = [1, 1]} : vector<32x24xf32> to vector<4x24xf32>
    %cst_79 = arith.constant dense<0.000000e+00> : vector<4x24xf32>
    %300 = tpu.matmul %245, %2, %cst_79 {dimension_numbers = #tpu.dot_dimension_numbers<[1], [0], [0], [1], [0, 0, 1, 1], [], []>} : vector<4x8xf32>, vector<8x24xf32>, vector<4x24xf32> -> vector<4x24xf32>
    %301 = vector.broadcast %3 : vector<1x24xf32> to vector<4x24xf32>
    %302 = arith.addf %300, %301 : vector<4x24xf32>
    %303 = vector.extract_strided_slice %299 {offsets = [0, 0], sizes = [4, 8], strides = [1, 1]} : vector<4x24xf32> to vector<4x8xf32>
    %304 = vector.extract_strided_slice %302 {offsets = [0, 0], sizes = [4, 8], strides = [1, 1]} : vector<4x24xf32> to vector<4x8xf32>
    %305 = arith.addf %303, %304 : vector<4x8xf32>
    %306 = arith.negf %305 : vector<4x8xf32>
    %307 = math.exp %306 : vector<4x8xf32>
    %cst_80 = arith.constant 1.000000e+00 : f32
    %308 = vector.broadcast %cst_80 : f32 to vector<4x8xf32>
    %309 = arith.addf %308, %307 : vector<4x8xf32>
    %310 = arith.divf %308, %309 : vector<4x8xf32>
    %311 = vector.extract_strided_slice %299 {offsets = [0, 8], sizes = [4, 8], strides = [1, 1]} : vector<4x24xf32> to vector<4x8xf32>
    %312 = vector.extract_strided_slice %302 {offsets = [0, 8], sizes = [4, 8], strides = [1, 1]} : vector<4x24xf32> to vector<4x8xf32>
    %313 = arith.addf %311, %312 : vector<4x8xf32>
    %314 = arith.negf %313 : vector<4x8xf32>
    %315 = math.exp %314 : vector<4x8xf32>
    %cst_81 = arith.constant 1.000000e+00 : f32
    %316 = vector.broadcast %cst_81 : f32 to vector<4x8xf32>
    %317 = arith.addf %316, %315 : vector<4x8xf32>
    %318 = arith.divf %316, %317 : vector<4x8xf32>
    %319 = vector.extract_strided_slice %299 {offsets = [0, 16], sizes = [4, 8], strides = [1, 1]} : vector<4x24xf32> to vector<4x8xf32>
    %320 = vector.extract_strided_slice %302 {offsets = [0, 16], sizes = [4, 8], strides = [1, 1]} : vector<4x24xf32> to vector<4x8xf32>
    %321 = arith.mulf %310, %320 : vector<4x8xf32>
    %322 = arith.addf %319, %321 : vector<4x8xf32>
    %323 = math.tanh %322 : vector<4x8xf32>
    %cst_82 = arith.constant 1.000000e+00 : f32
    %324 = vector.broadcast %cst_82 : f32 to vector<4x8xf32>
    %325 = arith.subf %324, %318 : vector<4x8xf32>
    %326 = arith.mulf %325, %323 : vector<4x8xf32>
    %327 = arith.mulf %318, %245 : vector<4x8xf32>
    %328 = arith.addf %326, %327 : vector<4x8xf32>
    %cst_83 = arith.constant 0.000000e+00 : f32
    %329 = vector.broadcast %cst_83 : f32 to vector<4x2xf32>
    %330 = arith.subf %329, %298 : vector<4x2xf32>
    %331 = math.exp %330 : vector<4x2xf32>
    %332 = vector.broadcast %6 : vector<1x2xf32> to vector<4x2xf32>
    %333 = arith.mulf %331, %332 : vector<4x2xf32>
    %cst_84 = arith.constant dense<0.000000e+00> : vector<2xf32>
    %334 = vector.multi_reduction <add>, %333, %cst_84 [0] : vector<4x2xf32> to vector<2xf32>
    %335 = vector.shape_cast %334 : vector<2xf32> to vector<1x2xf32>
    %cst_85 = arith.constant 4.000000e+00 : f32
    %336 = vector.broadcast %cst_85 : f32 to vector<1x2xf32>
    %337 = arith.divf %335, %336 : vector<1x2xf32>
    %cst_86 = arith.constant dense<0.000000e+00> : vector<4x7xf32>
    %338 = tpu.matmul %328, %4, %cst_86 {dimension_numbers = #tpu.dot_dimension_numbers<[1], [0], [0], [1], [0, 0, 1, 1], [], []>} : vector<4x8xf32>, vector<8x7xf32>, vector<4x7xf32> -> vector<4x7xf32>
    %339 = vector.broadcast %5 : vector<1x7xf32> to vector<4x7xf32>
    %340 = arith.addf %338, %339 : vector<4x7xf32>
    %341 = vector.extract_strided_slice %340 {offsets = [0, 0], sizes = [4, 2], strides = [1, 1]} : vector<4x7xf32> to vector<4x2xf32>
    %cst_87 = arith.constant 0.000000e+00 : f32
    %342 = vector.broadcast %cst_87 : f32 to vector<4x2xf32>
    %343 = arith.subf %342, %341 : vector<4x2xf32>
    %344 = math.exp %343 : vector<4x2xf32>
    %345 = vector.broadcast %6 : vector<1x2xf32> to vector<4x2xf32>
    %346 = arith.mulf %344, %345 : vector<4x2xf32>
    %347 = vector.broadcast %337 : vector<1x2xf32> to vector<4x2xf32>
    %348 = arith.addf %347, %346 : vector<4x2xf32>
    %c0_88 = arith.constant 0 : index
    %c6 = arith.constant 6 : index
    %349 = vector.load %arg15[%c0_88, %c6] : memref<4x16xf32, #tpu.memory_space<vmem>>, vector<4x2xf32>
    tpu.vector_store %arg15[%c0_88, %c6], %348 {strides = array<i32>} : memref<4x16xf32, #tpu.memory_space<vmem>>, vector<4x2xf32>,
    %350 = vector.extract_strided_slice %340 {offsets = [0, 2], sizes = [4, 5], strides = [1, 1]} : vector<4x7xf32> to vector<4x5xf32>
    %c0_89 = arith.constant 0 : index
    %c15 = arith.constant 15 : index
    %351 = vector.load %arg14[%c0_89, %c15] : memref<4x35xf32, #tpu.memory_space<vmem>>, vector<4x5xf32>
    tpu.vector_store %arg14[%c0_89, %c15], %350 {strides = array<i32>} : memref<4x35xf32, #tpu.memory_space<vmem>>, vector<4x5xf32>,
    %352 = vector.extract_strided_slice %12 {offsets = [16, 0], sizes = [4, 6], strides = [1, 1]} : vector<32x6xf32> to vector<4x6xf32>
    %cst_90 = arith.constant dense<0.000000e+00> : vector<4x6xf32>
    %353 = tpu.matmul %298, %0, %cst_90 {dimension_numbers = #tpu.dot_dimension_numbers<[1], [0], [0], [1], [0, 0, 1, 1], [], []>} : vector<4x2xf32>, vector<2x6xf32>, vector<4x6xf32> -> vector<4x6xf32>
    %354 = vector.broadcast %1 : vector<1x6xf32> to vector<4x6xf32>
    %355 = arith.addf %353, %354 : vector<4x6xf32>
    %356 = vector.extract_strided_slice %352 {offsets = [0, 0], sizes = [4, 2], strides = [1, 1]} : vector<4x6xf32> to vector<4x2xf32>
    %357 = vector.extract_strided_slice %355 {offsets = [0, 0], sizes = [4, 2], strides = [1, 1]} : vector<4x6xf32> to vector<4x2xf32>
    %358 = arith.addf %356, %357 : vector<4x2xf32>
    %359 = arith.negf %358 : vector<4x2xf32>
    %360 = math.exp %359 : vector<4x2xf32>
    %cst_91 = arith.constant 1.000000e+00 : f32
    %361 = vector.broadcast %cst_91 : f32 to vector<4x2xf32>
    %362 = arith.addf %361, %360 : vector<4x2xf32>
    %363 = arith.divf %361, %362 : vector<4x2xf32>
    %364 = vector.extract_strided_slice %352 {offsets = [0, 2], sizes = [4, 2], strides = [1, 1]} : vector<4x6xf32> to vector<4x2xf32>
    %365 = vector.extract_strided_slice %355 {offsets = [0, 2], sizes = [4, 2], strides = [1, 1]} : vector<4x6xf32> to vector<4x2xf32>
    %366 = arith.addf %364, %365 : vector<4x2xf32>
    %367 = arith.negf %366 : vector<4x2xf32>
    %368 = math.exp %367 : vector<4x2xf32>
    %cst_92 = arith.constant 1.000000e+00 : f32
    %369 = vector.broadcast %cst_92 : f32 to vector<4x2xf32>
    %370 = arith.addf %369, %368 : vector<4x2xf32>
    %371 = arith.divf %369, %370 : vector<4x2xf32>
    %372 = vector.extract_strided_slice %352 {offsets = [0, 4], sizes = [4, 2], strides = [1, 1]} : vector<4x6xf32> to vector<4x2xf32>
    %373 = vector.extract_strided_slice %355 {offsets = [0, 4], sizes = [4, 2], strides = [1, 1]} : vector<4x6xf32> to vector<4x2xf32>
    %374 = arith.mulf %363, %373 : vector<4x2xf32>
    %375 = arith.addf %372, %374 : vector<4x2xf32>
    %376 = math.tanh %375 : vector<4x2xf32>
    %cst_93 = arith.constant 1.000000e+00 : f32
    %377 = vector.broadcast %cst_93 : f32 to vector<4x2xf32>
    %378 = arith.subf %377, %371 : vector<4x2xf32>
    %379 = arith.mulf %378, %376 : vector<4x2xf32>
    %380 = arith.mulf %371, %298 : vector<4x2xf32>
    %381 = arith.addf %379, %380 : vector<4x2xf32>
    %382 = vector.extract_strided_slice %17 {offsets = [16, 0], sizes = [4, 24], strides = [1, 1]} : vector<32x24xf32> to vector<4x24xf32>
    %cst_94 = arith.constant dense<0.000000e+00> : vector<4x24xf32>
    %383 = tpu.matmul %328, %2, %cst_94 {dimension_numbers = #tpu.dot_dimension_numbers<[1], [0], [0], [1], [0, 0, 1, 1], [], []>} : vector<4x8xf32>, vector<8x24xf32>, vector<4x24xf32> -> vector<4x24xf32>
    %384 = vector.broadcast %3 : vector<1x24xf32> to vector<4x24xf32>
    %385 = arith.addf %383, %384 : vector<4x24xf32>
    %386 = vector.extract_strided_slice %382 {offsets = [0, 0], sizes = [4, 8], strides = [1, 1]} : vector<4x24xf32> to vector<4x8xf32>
    %387 = vector.extract_strided_slice %385 {offsets = [0, 0], sizes = [4, 8], strides = [1, 1]} : vector<4x24xf32> to vector<4x8xf32>
    %388 = arith.addf %386, %387 : vector<4x8xf32>
    %389 = arith.negf %388 : vector<4x8xf32>
    %390 = math.exp %389 : vector<4x8xf32>
    %cst_95 = arith.constant 1.000000e+00 : f32
    %391 = vector.broadcast %cst_95 : f32 to vector<4x8xf32>
    %392 = arith.addf %391, %390 : vector<4x8xf32>
    %393 = arith.divf %391, %392 : vector<4x8xf32>
    %394 = vector.extract_strided_slice %382 {offsets = [0, 8], sizes = [4, 8], strides = [1, 1]} : vector<4x24xf32> to vector<4x8xf32>
    %395 = vector.extract_strided_slice %385 {offsets = [0, 8], sizes = [4, 8], strides = [1, 1]} : vector<4x24xf32> to vector<4x8xf32>
    %396 = arith.addf %394, %395 : vector<4x8xf32>
    %397 = arith.negf %396 : vector<4x8xf32>
    %398 = math.exp %397 : vector<4x8xf32>
    %cst_96 = arith.constant 1.000000e+00 : f32
    %399 = vector.broadcast %cst_96 : f32 to vector<4x8xf32>
    %400 = arith.addf %399, %398 : vector<4x8xf32>
    %401 = arith.divf %399, %400 : vector<4x8xf32>
    %402 = vector.extract_strided_slice %382 {offsets = [0, 16], sizes = [4, 8], strides = [1, 1]} : vector<4x24xf32> to vector<4x8xf32>
    %403 = vector.extract_strided_slice %385 {offsets = [0, 16], sizes = [4, 8], strides = [1, 1]} : vector<4x24xf32> to vector<4x8xf32>
    %404 = arith.mulf %393, %403 : vector<4x8xf32>
    %405 = arith.addf %402, %404 : vector<4x8xf32>
    %406 = math.tanh %405 : vector<4x8xf32>
    %cst_97 = arith.constant 1.000000e+00 : f32
    %407 = vector.broadcast %cst_97 : f32 to vector<4x8xf32>
    %408 = arith.subf %407, %401 : vector<4x8xf32>
    %409 = arith.mulf %408, %406 : vector<4x8xf32>
    %410 = arith.mulf %401, %328 : vector<4x8xf32>
    %411 = arith.addf %409, %410 : vector<4x8xf32>
    %cst_98 = arith.constant 0.000000e+00 : f32
    %412 = vector.broadcast %cst_98 : f32 to vector<4x2xf32>
    %413 = arith.subf %412, %381 : vector<4x2xf32>
    %414 = math.exp %413 : vector<4x2xf32>
    %415 = vector.broadcast %6 : vector<1x2xf32> to vector<4x2xf32>
    %416 = arith.mulf %414, %415 : vector<4x2xf32>
    %cst_99 = arith.constant dense<0.000000e+00> : vector<2xf32>
    %417 = vector.multi_reduction <add>, %416, %cst_99 [0] : vector<4x2xf32> to vector<2xf32>
    %418 = vector.shape_cast %417 : vector<2xf32> to vector<1x2xf32>
    %cst_100 = arith.constant 4.000000e+00 : f32
    %419 = vector.broadcast %cst_100 : f32 to vector<1x2xf32>
    %420 = arith.divf %418, %419 : vector<1x2xf32>
    %cst_101 = arith.constant dense<0.000000e+00> : vector<4x7xf32>
    %421 = tpu.matmul %411, %4, %cst_101 {dimension_numbers = #tpu.dot_dimension_numbers<[1], [0], [0], [1], [0, 0, 1, 1], [], []>} : vector<4x8xf32>, vector<8x7xf32>, vector<4x7xf32> -> vector<4x7xf32>
    %422 = vector.broadcast %5 : vector<1x7xf32> to vector<4x7xf32>
    %423 = arith.addf %421, %422 : vector<4x7xf32>
    %424 = vector.extract_strided_slice %423 {offsets = [0, 0], sizes = [4, 2], strides = [1, 1]} : vector<4x7xf32> to vector<4x2xf32>
    %cst_102 = arith.constant 0.000000e+00 : f32
    %425 = vector.broadcast %cst_102 : f32 to vector<4x2xf32>
    %426 = arith.subf %425, %424 : vector<4x2xf32>
    %427 = math.exp %426 : vector<4x2xf32>
    %428 = vector.broadcast %6 : vector<1x2xf32> to vector<4x2xf32>
    %429 = arith.mulf %427, %428 : vector<4x2xf32>
    %430 = vector.broadcast %420 : vector<1x2xf32> to vector<4x2xf32>
    %431 = arith.addf %430, %429 : vector<4x2xf32>
    %c0_103 = arith.constant 0 : index
    %c8 = arith.constant 8 : index
    %432 = vector.load %arg15[%c0_103, %c8] : memref<4x16xf32, #tpu.memory_space<vmem>>, vector<4x2xf32>
    tpu.vector_store %arg15[%c0_103, %c8], %431 {strides = array<i32>} : memref<4x16xf32, #tpu.memory_space<vmem>>, vector<4x2xf32>,
    %433 = vector.extract_strided_slice %423 {offsets = [0, 2], sizes = [4, 5], strides = [1, 1]} : vector<4x7xf32> to vector<4x5xf32>
    %c0_104 = arith.constant 0 : index
    %c20 = arith.constant 20 : index
    %434 = vector.load %arg14[%c0_104, %c20] : memref<4x35xf32, #tpu.memory_space<vmem>>, vector<4x5xf32>
    tpu.vector_store %arg14[%c0_104, %c20], %433 {strides = array<i32>} : memref<4x35xf32, #tpu.memory_space<vmem>>, vector<4x5xf32>,
    %435 = vector.extract_strided_slice %12 {offsets = [20, 0], sizes = [4, 6], strides = [1, 1]} : vector<32x6xf32> to vector<4x6xf32>
    %cst_105 = arith.constant dense<0.000000e+00> : vector<4x6xf32>
    %436 = tpu.matmul %381, %0, %cst_105 {dimension_numbers = #tpu.dot_dimension_numbers<[1], [0], [0], [1], [0, 0, 1, 1], [], []>} : vector<4x2xf32>, vector<2x6xf32>, vector<4x6xf32> -> vector<4x6xf32>
    %437 = vector.broadcast %1 : vector<1x6xf32> to vector<4x6xf32>
    %438 = arith.addf %436, %437 : vector<4x6xf32>
    %439 = vector.extract_strided_slice %435 {offsets = [0, 0], sizes = [4, 2], strides = [1, 1]} : vector<4x6xf32> to vector<4x2xf32>
    %440 = vector.extract_strided_slice %438 {offsets = [0, 0], sizes = [4, 2], strides = [1, 1]} : vector<4x6xf32> to vector<4x2xf32>
    %441 = arith.addf %439, %440 : vector<4x2xf32>
    %442 = arith.negf %441 : vector<4x2xf32>
    %443 = math.exp %442 : vector<4x2xf32>
    %cst_106 = arith.constant 1.000000e+00 : f32
    %444 = vector.broadcast %cst_106 : f32 to vector<4x2xf32>
    %445 = arith.addf %444, %443 : vector<4x2xf32>
    %446 = arith.divf %444, %445 : vector<4x2xf32>
    %447 = vector.extract_strided_slice %435 {offsets = [0, 2], sizes = [4, 2], strides = [1, 1]} : vector<4x6xf32> to vector<4x2xf32>
    %448 = vector.extract_strided_slice %438 {offsets = [0, 2], sizes = [4, 2], strides = [1, 1]} : vector<4x6xf32> to vector<4x2xf32>
    %449 = arith.addf %447, %448 : vector<4x2xf32>
    %450 = arith.negf %449 : vector<4x2xf32>
    %451 = math.exp %450 : vector<4x2xf32>
    %cst_107 = arith.constant 1.000000e+00 : f32
    %452 = vector.broadcast %cst_107 : f32 to vector<4x2xf32>
    %453 = arith.addf %452, %451 : vector<4x2xf32>
    %454 = arith.divf %452, %453 : vector<4x2xf32>
    %455 = vector.extract_strided_slice %435 {offsets = [0, 4], sizes = [4, 2], strides = [1, 1]} : vector<4x6xf32> to vector<4x2xf32>
    %456 = vector.extract_strided_slice %438 {offsets = [0, 4], sizes = [4, 2], strides = [1, 1]} : vector<4x6xf32> to vector<4x2xf32>
    %457 = arith.mulf %446, %456 : vector<4x2xf32>
    %458 = arith.addf %455, %457 : vector<4x2xf32>
    %459 = math.tanh %458 : vector<4x2xf32>
    %cst_108 = arith.constant 1.000000e+00 : f32
    %460 = vector.broadcast %cst_108 : f32 to vector<4x2xf32>
    %461 = arith.subf %460, %454 : vector<4x2xf32>
    %462 = arith.mulf %461, %459 : vector<4x2xf32>
    %463 = arith.mulf %454, %381 : vector<4x2xf32>
    %464 = arith.addf %462, %463 : vector<4x2xf32>
    %465 = vector.extract_strided_slice %17 {offsets = [20, 0], sizes = [4, 24], strides = [1, 1]} : vector<32x24xf32> to vector<4x24xf32>
    %cst_109 = arith.constant dense<0.000000e+00> : vector<4x24xf32>
    %466 = tpu.matmul %411, %2, %cst_109 {dimension_numbers = #tpu.dot_dimension_numbers<[1], [0], [0], [1], [0, 0, 1, 1], [], []>} : vector<4x8xf32>, vector<8x24xf32>, vector<4x24xf32> -> vector<4x24xf32>
    %467 = vector.broadcast %3 : vector<1x24xf32> to vector<4x24xf32>
    %468 = arith.addf %466, %467 : vector<4x24xf32>
    %469 = vector.extract_strided_slice %465 {offsets = [0, 0], sizes = [4, 8], strides = [1, 1]} : vector<4x24xf32> to vector<4x8xf32>
    %470 = vector.extract_strided_slice %468 {offsets = [0, 0], sizes = [4, 8], strides = [1, 1]} : vector<4x24xf32> to vector<4x8xf32>
    %471 = arith.addf %469, %470 : vector<4x8xf32>
    %472 = arith.negf %471 : vector<4x8xf32>
    %473 = math.exp %472 : vector<4x8xf32>
    %cst_110 = arith.constant 1.000000e+00 : f32
    %474 = vector.broadcast %cst_110 : f32 to vector<4x8xf32>
    %475 = arith.addf %474, %473 : vector<4x8xf32>
    %476 = arith.divf %474, %475 : vector<4x8xf32>
    %477 = vector.extract_strided_slice %465 {offsets = [0, 8], sizes = [4, 8], strides = [1, 1]} : vector<4x24xf32> to vector<4x8xf32>
    %478 = vector.extract_strided_slice %468 {offsets = [0, 8], sizes = [4, 8], strides = [1, 1]} : vector<4x24xf32> to vector<4x8xf32>
    %479 = arith.addf %477, %478 : vector<4x8xf32>
    %480 = arith.negf %479 : vector<4x8xf32>
    %481 = math.exp %480 : vector<4x8xf32>
    %cst_111 = arith.constant 1.000000e+00 : f32
    %482 = vector.broadcast %cst_111 : f32 to vector<4x8xf32>
    %483 = arith.addf %482, %481 : vector<4x8xf32>
    %484 = arith.divf %482, %483 : vector<4x8xf32>
    %485 = vector.extract_strided_slice %465 {offsets = [0, 16], sizes = [4, 8], strides = [1, 1]} : vector<4x24xf32> to vector<4x8xf32>
    %486 = vector.extract_strided_slice %468 {offsets = [0, 16], sizes = [4, 8], strides = [1, 1]} : vector<4x24xf32> to vector<4x8xf32>
    %487 = arith.mulf %476, %486 : vector<4x8xf32>
    %488 = arith.addf %485, %487 : vector<4x8xf32>
    %489 = math.tanh %488 : vector<4x8xf32>
    %cst_112 = arith.constant 1.000000e+00 : f32
    %490 = vector.broadcast %cst_112 : f32 to vector<4x8xf32>
    %491 = arith.subf %490, %484 : vector<4x8xf32>
    %492 = arith.mulf %491, %489 : vector<4x8xf32>
    %493 = arith.mulf %484, %411 : vector<4x8xf32>
    %494 = arith.addf %492, %493 : vector<4x8xf32>
    %cst_113 = arith.constant 0.000000e+00 : f32
    %495 = vector.broadcast %cst_113 : f32 to vector<4x2xf32>
    %496 = arith.subf %495, %464 : vector<4x2xf32>
    %497 = math.exp %496 : vector<4x2xf32>
    %498 = vector.broadcast %6 : vector<1x2xf32> to vector<4x2xf32>
    %499 = arith.mulf %497, %498 : vector<4x2xf32>
    %cst_114 = arith.constant dense<0.000000e+00> : vector<2xf32>
    %500 = vector.multi_reduction <add>, %499, %cst_114 [0] : vector<4x2xf32> to vector<2xf32>
    %501 = vector.shape_cast %500 : vector<2xf32> to vector<1x2xf32>
    %cst_115 = arith.constant 4.000000e+00 : f32
    %502 = vector.broadcast %cst_115 : f32 to vector<1x2xf32>
    %503 = arith.divf %501, %502 : vector<1x2xf32>
    %cst_116 = arith.constant dense<0.000000e+00> : vector<4x7xf32>
    %504 = tpu.matmul %494, %4, %cst_116 {dimension_numbers = #tpu.dot_dimension_numbers<[1], [0], [0], [1], [0, 0, 1, 1], [], []>} : vector<4x8xf32>, vector<8x7xf32>, vector<4x7xf32> -> vector<4x7xf32>
    %505 = vector.broadcast %5 : vector<1x7xf32> to vector<4x7xf32>
    %506 = arith.addf %504, %505 : vector<4x7xf32>
    %507 = vector.extract_strided_slice %506 {offsets = [0, 0], sizes = [4, 2], strides = [1, 1]} : vector<4x7xf32> to vector<4x2xf32>
    %cst_117 = arith.constant 0.000000e+00 : f32
    %508 = vector.broadcast %cst_117 : f32 to vector<4x2xf32>
    %509 = arith.subf %508, %507 : vector<4x2xf32>
    %510 = math.exp %509 : vector<4x2xf32>
    %511 = vector.broadcast %6 : vector<1x2xf32> to vector<4x2xf32>
    %512 = arith.mulf %510, %511 : vector<4x2xf32>
    %513 = vector.broadcast %503 : vector<1x2xf32> to vector<4x2xf32>
    %514 = arith.addf %513, %512 : vector<4x2xf32>
    %c0_118 = arith.constant 0 : index
    %c10_119 = arith.constant 10 : index
    %515 = vector.load %arg15[%c0_118, %c10_119] : memref<4x16xf32, #tpu.memory_space<vmem>>, vector<4x2xf32>
    tpu.vector_store %arg15[%c0_118, %c10_119], %514 {strides = array<i32>} : memref<4x16xf32, #tpu.memory_space<vmem>>, vector<4x2xf32>,
    %516 = vector.extract_strided_slice %506 {offsets = [0, 2], sizes = [4, 5], strides = [1, 1]} : vector<4x7xf32> to vector<4x5xf32>
    %c0_120 = arith.constant 0 : index
    %c25 = arith.constant 25 : index
    %517 = vector.load %arg14[%c0_120, %c25] : memref<4x35xf32, #tpu.memory_space<vmem>>, vector<4x5xf32>
    tpu.vector_store %arg14[%c0_120, %c25], %516 {strides = array<i32>} : memref<4x35xf32, #tpu.memory_space<vmem>>, vector<4x5xf32>,
    %518 = vector.extract_strided_slice %12 {offsets = [24, 0], sizes = [4, 6], strides = [1, 1]} : vector<32x6xf32> to vector<4x6xf32>
    %cst_121 = arith.constant dense<0.000000e+00> : vector<4x6xf32>
    %519 = tpu.matmul %464, %0, %cst_121 {dimension_numbers = #tpu.dot_dimension_numbers<[1], [0], [0], [1], [0, 0, 1, 1], [], []>} : vector<4x2xf32>, vector<2x6xf32>, vector<4x6xf32> -> vector<4x6xf32>
    %520 = vector.broadcast %1 : vector<1x6xf32> to vector<4x6xf32>
    %521 = arith.addf %519, %520 : vector<4x6xf32>
    %522 = vector.extract_strided_slice %518 {offsets = [0, 0], sizes = [4, 2], strides = [1, 1]} : vector<4x6xf32> to vector<4x2xf32>
    %523 = vector.extract_strided_slice %521 {offsets = [0, 0], sizes = [4, 2], strides = [1, 1]} : vector<4x6xf32> to vector<4x2xf32>
    %524 = arith.addf %522, %523 : vector<4x2xf32>
    %525 = arith.negf %524 : vector<4x2xf32>
    %526 = math.exp %525 : vector<4x2xf32>
    %cst_122 = arith.constant 1.000000e+00 : f32
    %527 = vector.broadcast %cst_122 : f32 to vector<4x2xf32>
    %528 = arith.addf %527, %526 : vector<4x2xf32>
    %529 = arith.divf %527, %528 : vector<4x2xf32>
    %530 = vector.extract_strided_slice %518 {offsets = [0, 2], sizes = [4, 2], strides = [1, 1]} : vector<4x6xf32> to vector<4x2xf32>
    %531 = vector.extract_strided_slice %521 {offsets = [0, 2], sizes = [4, 2], strides = [1, 1]} : vector<4x6xf32> to vector<4x2xf32>
    %532 = arith.addf %530, %531 : vector<4x2xf32>
    %533 = arith.negf %532 : vector<4x2xf32>
    %534 = math.exp %533 : vector<4x2xf32>
    %cst_123 = arith.constant 1.000000e+00 : f32
    %535 = vector.broadcast %cst_123 : f32 to vector<4x2xf32>
    %536 = arith.addf %535, %534 : vector<4x2xf32>
    %537 = arith.divf %535, %536 : vector<4x2xf32>
    %538 = vector.extract_strided_slice %518 {offsets = [0, 4], sizes = [4, 2], strides = [1, 1]} : vector<4x6xf32> to vector<4x2xf32>
    %539 = vector.extract_strided_slice %521 {offsets = [0, 4], sizes = [4, 2], strides = [1, 1]} : vector<4x6xf32> to vector<4x2xf32>
    %540 = arith.mulf %529, %539 : vector<4x2xf32>
    %541 = arith.addf %538, %540 : vector<4x2xf32>
    %542 = math.tanh %541 : vector<4x2xf32>
    %cst_124 = arith.constant 1.000000e+00 : f32
    %543 = vector.broadcast %cst_124 : f32 to vector<4x2xf32>
    %544 = arith.subf %543, %537 : vector<4x2xf32>
    %545 = arith.mulf %544, %542 : vector<4x2xf32>
    %546 = arith.mulf %537, %464 : vector<4x2xf32>
    %547 = arith.addf %545, %546 : vector<4x2xf32>
    %548 = vector.extract_strided_slice %17 {offsets = [24, 0], sizes = [4, 24], strides = [1, 1]} : vector<32x24xf32> to vector<4x24xf32>
    %cst_125 = arith.constant dense<0.000000e+00> : vector<4x24xf32>
    %549 = tpu.matmul %494, %2, %cst_125 {dimension_numbers = #tpu.dot_dimension_numbers<[1], [0], [0], [1], [0, 0, 1, 1], [], []>} : vector<4x8xf32>, vector<8x24xf32>, vector<4x24xf32> -> vector<4x24xf32>
    %550 = vector.broadcast %3 : vector<1x24xf32> to vector<4x24xf32>
    %551 = arith.addf %549, %550 : vector<4x24xf32>
    %552 = vector.extract_strided_slice %548 {offsets = [0, 0], sizes = [4, 8], strides = [1, 1]} : vector<4x24xf32> to vector<4x8xf32>
    %553 = vector.extract_strided_slice %551 {offsets = [0, 0], sizes = [4, 8], strides = [1, 1]} : vector<4x24xf32> to vector<4x8xf32>
    %554 = arith.addf %552, %553 : vector<4x8xf32>
    %555 = arith.negf %554 : vector<4x8xf32>
    %556 = math.exp %555 : vector<4x8xf32>
    %cst_126 = arith.constant 1.000000e+00 : f32
    %557 = vector.broadcast %cst_126 : f32 to vector<4x8xf32>
    %558 = arith.addf %557, %556 : vector<4x8xf32>
    %559 = arith.divf %557, %558 : vector<4x8xf32>
    %560 = vector.extract_strided_slice %548 {offsets = [0, 8], sizes = [4, 8], strides = [1, 1]} : vector<4x24xf32> to vector<4x8xf32>
    %561 = vector.extract_strided_slice %551 {offsets = [0, 8], sizes = [4, 8], strides = [1, 1]} : vector<4x24xf32> to vector<4x8xf32>
    %562 = arith.addf %560, %561 : vector<4x8xf32>
    %563 = arith.negf %562 : vector<4x8xf32>
    %564 = math.exp %563 : vector<4x8xf32>
    %cst_127 = arith.constant 1.000000e+00 : f32
    %565 = vector.broadcast %cst_127 : f32 to vector<4x8xf32>
    %566 = arith.addf %565, %564 : vector<4x8xf32>
    %567 = arith.divf %565, %566 : vector<4x8xf32>
    %568 = vector.extract_strided_slice %548 {offsets = [0, 16], sizes = [4, 8], strides = [1, 1]} : vector<4x24xf32> to vector<4x8xf32>
    %569 = vector.extract_strided_slice %551 {offsets = [0, 16], sizes = [4, 8], strides = [1, 1]} : vector<4x24xf32> to vector<4x8xf32>
    %570 = arith.mulf %559, %569 : vector<4x8xf32>
    %571 = arith.addf %568, %570 : vector<4x8xf32>
    %572 = math.tanh %571 : vector<4x8xf32>
    %cst_128 = arith.constant 1.000000e+00 : f32
    %573 = vector.broadcast %cst_128 : f32 to vector<4x8xf32>
    %574 = arith.subf %573, %567 : vector<4x8xf32>
    %575 = arith.mulf %574, %572 : vector<4x8xf32>
    %576 = arith.mulf %567, %494 : vector<4x8xf32>
    %577 = arith.addf %575, %576 : vector<4x8xf32>
    %cst_129 = arith.constant 0.000000e+00 : f32
    %578 = vector.broadcast %cst_129 : f32 to vector<4x2xf32>
    %579 = arith.subf %578, %547 : vector<4x2xf32>
    %580 = math.exp %579 : vector<4x2xf32>
    %581 = vector.broadcast %6 : vector<1x2xf32> to vector<4x2xf32>
    %582 = arith.mulf %580, %581 : vector<4x2xf32>
    %cst_130 = arith.constant dense<0.000000e+00> : vector<2xf32>
    %583 = vector.multi_reduction <add>, %582, %cst_130 [0] : vector<4x2xf32> to vector<2xf32>
    %584 = vector.shape_cast %583 : vector<2xf32> to vector<1x2xf32>
    %cst_131 = arith.constant 4.000000e+00 : f32
    %585 = vector.broadcast %cst_131 : f32 to vector<1x2xf32>
    %586 = arith.divf %584, %585 : vector<1x2xf32>
    %cst_132 = arith.constant dense<0.000000e+00> : vector<4x7xf32>
    %587 = tpu.matmul %577, %4, %cst_132 {dimension_numbers = #tpu.dot_dimension_numbers<[1], [0], [0], [1], [0, 0, 1, 1], [], []>} : vector<4x8xf32>, vector<8x7xf32>, vector<4x7xf32> -> vector<4x7xf32>
    %588 = vector.broadcast %5 : vector<1x7xf32> to vector<4x7xf32>
    %589 = arith.addf %587, %588 : vector<4x7xf32>
    %590 = vector.extract_strided_slice %589 {offsets = [0, 0], sizes = [4, 2], strides = [1, 1]} : vector<4x7xf32> to vector<4x2xf32>
    %cst_133 = arith.constant 0.000000e+00 : f32
    %591 = vector.broadcast %cst_133 : f32 to vector<4x2xf32>
    %592 = arith.subf %591, %590 : vector<4x2xf32>
    %593 = math.exp %592 : vector<4x2xf32>
    %594 = vector.broadcast %6 : vector<1x2xf32> to vector<4x2xf32>
    %595 = arith.mulf %593, %594 : vector<4x2xf32>
    %596 = vector.broadcast %586 : vector<1x2xf32> to vector<4x2xf32>
    %597 = arith.addf %596, %595 : vector<4x2xf32>
    %c0_134 = arith.constant 0 : index
    %c12 = arith.constant 12 : index
    %598 = vector.load %arg15[%c0_134, %c12] : memref<4x16xf32, #tpu.memory_space<vmem>>, vector<4x2xf32>
    tpu.vector_store %arg15[%c0_134, %c12], %597 {strides = array<i32>} : memref<4x16xf32, #tpu.memory_space<vmem>>, vector<4x2xf32>,
    %599 = vector.extract_strided_slice %589 {offsets = [0, 2], sizes = [4, 5], strides = [1, 1]} : vector<4x7xf32> to vector<4x5xf32>
    %c0_135 = arith.constant 0 : index
    %c30 = arith.constant 30 : index
    %600 = vector.load %arg14[%c0_135, %c30] : memref<4x35xf32, #tpu.memory_space<vmem>>, vector<4x5xf32>
    tpu.vector_store %arg14[%c0_135, %c30], %599 {strides = array<i32>} : memref<4x35xf32, #tpu.memory_space<vmem>>, vector<4x5xf32>,
    %601 = vector.extract_strided_slice %12 {offsets = [28, 0], sizes = [4, 6], strides = [1, 1]} : vector<32x6xf32> to vector<4x6xf32>
    %cst_136 = arith.constant dense<0.000000e+00> : vector<4x6xf32>
    %602 = tpu.matmul %547, %0, %cst_136 {dimension_numbers = #tpu.dot_dimension_numbers<[1], [0], [0], [1], [0, 0, 1, 1], [], []>} : vector<4x2xf32>, vector<2x6xf32>, vector<4x6xf32> -> vector<4x6xf32>
    %603 = vector.broadcast %1 : vector<1x6xf32> to vector<4x6xf32>
    %604 = arith.addf %602, %603 : vector<4x6xf32>
    %605 = vector.extract_strided_slice %601 {offsets = [0, 0], sizes = [4, 2], strides = [1, 1]} : vector<4x6xf32> to vector<4x2xf32>
    %606 = vector.extract_strided_slice %604 {offsets = [0, 0], sizes = [4, 2], strides = [1, 1]} : vector<4x6xf32> to vector<4x2xf32>
    %607 = arith.addf %605, %606 : vector<4x2xf32>
    %608 = arith.negf %607 : vector<4x2xf32>
    %609 = math.exp %608 : vector<4x2xf32>
    %cst_137 = arith.constant 1.000000e+00 : f32
    %610 = vector.broadcast %cst_137 : f32 to vector<4x2xf32>
    %611 = arith.addf %610, %609 : vector<4x2xf32>
    %612 = arith.divf %610, %611 : vector<4x2xf32>
    %613 = vector.extract_strided_slice %601 {offsets = [0, 2], sizes = [4, 2], strides = [1, 1]} : vector<4x6xf32> to vector<4x2xf32>
    %614 = vector.extract_strided_slice %604 {offsets = [0, 2], sizes = [4, 2], strides = [1, 1]} : vector<4x6xf32> to vector<4x2xf32>
    %615 = arith.addf %613, %614 : vector<4x2xf32>
    %616 = arith.negf %615 : vector<4x2xf32>
    %617 = math.exp %616 : vector<4x2xf32>
    %cst_138 = arith.constant 1.000000e+00 : f32
    %618 = vector.broadcast %cst_138 : f32 to vector<4x2xf32>
    %619 = arith.addf %618, %617 : vector<4x2xf32>
    %620 = arith.divf %618, %619 : vector<4x2xf32>
    %621 = vector.extract_strided_slice %601 {offsets = [0, 4], sizes = [4, 2], strides = [1, 1]} : vector<4x6xf32> to vector<4x2xf32>
    %622 = vector.extract_strided_slice %604 {offsets = [0, 4], sizes = [4, 2], strides = [1, 1]} : vector<4x6xf32> to vector<4x2xf32>
    %623 = arith.mulf %612, %622 : vector<4x2xf32>
    %624 = arith.addf %621, %623 : vector<4x2xf32>
    %625 = math.tanh %624 : vector<4x2xf32>
    %cst_139 = arith.constant 1.000000e+00 : f32
    %626 = vector.broadcast %cst_139 : f32 to vector<4x2xf32>
    %627 = arith.subf %626, %620 : vector<4x2xf32>
    %628 = arith.mulf %627, %625 : vector<4x2xf32>
    %629 = arith.mulf %620, %547 : vector<4x2xf32>
    %630 = arith.addf %628, %629 : vector<4x2xf32>
    %631 = vector.extract_strided_slice %17 {offsets = [28, 0], sizes = [4, 24], strides = [1, 1]} : vector<32x24xf32> to vector<4x24xf32>
    %cst_140 = arith.constant dense<0.000000e+00> : vector<4x24xf32>
    %632 = tpu.matmul %577, %2, %cst_140 {dimension_numbers = #tpu.dot_dimension_numbers<[1], [0], [0], [1], [0, 0, 1, 1], [], []>} : vector<4x8xf32>, vector<8x24xf32>, vector<4x24xf32> -> vector<4x24xf32>
    %633 = vector.broadcast %3 : vector<1x24xf32> to vector<4x24xf32>
    %634 = arith.addf %632, %633 : vector<4x24xf32>
    %635 = vector.extract_strided_slice %631 {offsets = [0, 0], sizes = [4, 8], strides = [1, 1]} : vector<4x24xf32> to vector<4x8xf32>
    %636 = vector.extract_strided_slice %634 {offsets = [0, 0], sizes = [4, 8], strides = [1, 1]} : vector<4x24xf32> to vector<4x8xf32>
    %637 = arith.addf %635, %636 : vector<4x8xf32>
    %638 = arith.negf %637 : vector<4x8xf32>
    %639 = math.exp %638 : vector<4x8xf32>
    %cst_141 = arith.constant 1.000000e+00 : f32
    %640 = vector.broadcast %cst_141 : f32 to vector<4x8xf32>
    %641 = arith.addf %640, %639 : vector<4x8xf32>
    %642 = arith.divf %640, %641 : vector<4x8xf32>
    %643 = vector.extract_strided_slice %631 {offsets = [0, 8], sizes = [4, 8], strides = [1, 1]} : vector<4x24xf32> to vector<4x8xf32>
    %644 = vector.extract_strided_slice %634 {offsets = [0, 8], sizes = [4, 8], strides = [1, 1]} : vector<4x24xf32> to vector<4x8xf32>
    %645 = arith.addf %643, %644 : vector<4x8xf32>
    %646 = arith.negf %645 : vector<4x8xf32>
    %647 = math.exp %646 : vector<4x8xf32>
    %cst_142 = arith.constant 1.000000e+00 : f32
    %648 = vector.broadcast %cst_142 : f32 to vector<4x8xf32>
    %649 = arith.addf %648, %647 : vector<4x8xf32>
    %650 = arith.divf %648, %649 : vector<4x8xf32>
    %651 = vector.extract_strided_slice %631 {offsets = [0, 16], sizes = [4, 8], strides = [1, 1]} : vector<4x24xf32> to vector<4x8xf32>
    %652 = vector.extract_strided_slice %634 {offsets = [0, 16], sizes = [4, 8], strides = [1, 1]} : vector<4x24xf32> to vector<4x8xf32>
    %653 = arith.mulf %642, %652 : vector<4x8xf32>
    %654 = arith.addf %651, %653 : vector<4x8xf32>
    %655 = math.tanh %654 : vector<4x8xf32>
    %cst_143 = arith.constant 1.000000e+00 : f32
    %656 = vector.broadcast %cst_143 : f32 to vector<4x8xf32>
    %657 = arith.subf %656, %650 : vector<4x8xf32>
    %658 = arith.mulf %657, %655 : vector<4x8xf32>
    %659 = arith.mulf %650, %577 : vector<4x8xf32>
    %660 = arith.addf %658, %659 : vector<4x8xf32>
    %cst_144 = arith.constant 0.000000e+00 : f32
    %661 = vector.broadcast %cst_144 : f32 to vector<4x2xf32>
    %662 = arith.subf %661, %630 : vector<4x2xf32>
    %663 = math.exp %662 : vector<4x2xf32>
    %664 = vector.broadcast %6 : vector<1x2xf32> to vector<4x2xf32>
    %665 = arith.mulf %663, %664 : vector<4x2xf32>
    %cst_145 = arith.constant dense<0.000000e+00> : vector<2xf32>
    %666 = vector.multi_reduction <add>, %665, %cst_145 [0] : vector<4x2xf32> to vector<2xf32>
    %667 = vector.shape_cast %666 : vector<2xf32> to vector<1x2xf32>
    %cst_146 = arith.constant 4.000000e+00 : f32
    %668 = vector.broadcast %cst_146 : f32 to vector<1x2xf32>
    %669 = arith.divf %667, %668 : vector<1x2xf32>
    %cst_147 = arith.constant dense<0.000000e+00> : vector<4x7xf32>
    %670 = tpu.matmul %660, %4, %cst_147 {dimension_numbers = #tpu.dot_dimension_numbers<[1], [0], [0], [1], [0, 0, 1, 1], [], []>} : vector<4x8xf32>, vector<8x7xf32>, vector<4x7xf32> -> vector<4x7xf32>
    %671 = vector.broadcast %5 : vector<1x7xf32> to vector<4x7xf32>
    %672 = arith.addf %670, %671 : vector<4x7xf32>
    %673 = vector.extract_strided_slice %672 {offsets = [0, 0], sizes = [4, 2], strides = [1, 1]} : vector<4x7xf32> to vector<4x2xf32>
    %cst_148 = arith.constant 0.000000e+00 : f32
    %674 = vector.broadcast %cst_148 : f32 to vector<4x2xf32>
    %675 = arith.subf %674, %673 : vector<4x2xf32>
    %676 = math.exp %675 : vector<4x2xf32>
    %677 = vector.broadcast %6 : vector<1x2xf32> to vector<4x2xf32>
    %678 = arith.mulf %676, %677 : vector<4x2xf32>
    %679 = vector.broadcast %669 : vector<1x2xf32> to vector<4x2xf32>
    %680 = arith.addf %679, %678 : vector<4x2xf32>
    %c0_149 = arith.constant 0 : index
    %c14 = arith.constant 14 : index
    %681 = vector.load %arg15[%c0_149, %c14] : memref<4x16xf32, #tpu.memory_space<vmem>>, vector<4x2xf32>
    tpu.vector_store %arg15[%c0_149, %c14], %680 {strides = array<i32>} : memref<4x16xf32, #tpu.memory_space<vmem>>, vector<4x2xf32>,
    return
  }
}

</mosaic_0001>

<llo_original>
// kernel: global_plus_eps_forward.1
$region0: #{global_plus_eps_forward.1}
  #allocation0 [shape = 'u32[]', space=smem, size = 0x4, offset = 0x4, fixed_abs, tag = 'smem constant byte address 0x4 - core index']
  #allocation1 [shape = 'u32[72,128]{1,0:T(1,128)}', space=vmem, size = 0x9000, scoped, tag = 'internal scratch']
  %s0 = inlined_call_operand.vmem [shape: f32[32,5], index: 0, kind: input, shape index: {}]
  %s1 = inlined_call_operand.vmem [shape: f32[4,2], index: 1, kind: input, shape index: {}]
  %s2 = inlined_call_operand.vmem [shape: f32[4,8], index: 2, kind: input, shape index: {}]
  %s3 = inlined_call_operand.vmem [shape: f32[5,6], index: 3, kind: input, shape index: {}]
  %s4 = inlined_call_operand.vmem [shape: f32[2,6], index: 4, kind: input, shape index: {}]
  %s5 = inlined_call_operand.vmem [shape: f32[1,6], index: 5, kind: input, shape index: {}]
  %s6 = inlined_call_operand.vmem [shape: f32[1,6], index: 6, kind: input, shape index: {}]
  %s7 = inlined_call_operand.vmem [shape: f32[5,24], index: 7, kind: input, shape index: {}]
  %s8 = inlined_call_operand.vmem [shape: f32[8,24], index: 8, kind: input, shape index: {}]
  %s9 = inlined_call_operand.vmem [shape: f32[1,24], index: 9, kind: input, shape index: {}]
  %s10 = inlined_call_operand.vmem [shape: f32[1,24], index: 10, kind: input, shape index: {}]
  %s11 = inlined_call_operand.vmem [shape: f32[8,7], index: 11, kind: input, shape index: {}]
  %s12 = inlined_call_operand.vmem [shape: f32[1,7], index: 12, kind: input, shape index: {}]
  %s13 = inlined_call_operand.vmem [shape: f32[1,2], index: 13, kind: input, shape index: {}]
  %s14 = inlined_call_operand.vmem [shape: f32[4,35], index: 14, kind: output, shape index: {0}]
  %s15 = inlined_call_operand.vmem [shape: f32[4,16], index: 15, kind: output, shape index: {1}]
  %16 = xla_tuple %s14, %s15
  %s17 = sld [smem:[#allocation0]]
  $region74: #{global_plus_eps_forward.1} parent=0
    _
  %s19 = ssub.s32 1, %s17
  %s20 = scalar_select 0, %s19, %s17
  // Predicated region
  $region2: #{global_plus_eps_forward.1} parent=0 // pred_check
    _
  $region3: #{global_plus_eps_forward.1} parent=0 // pred_check_branch
    %22 = sbr.rel (0) target = $region5
  $region4: #{global_plus_eps_forward.1} parent=0 // pred_region
    _
  $region5: #{global_plus_eps_forward.1} parent=0 // pred_fallthru
    _
  // Predicated region
  $region6: #{global_plus_eps_forward.1} parent=0 // pred_check
    _
  $region7: #{global_plus_eps_forward.1} parent=0 // pred_check_branch
    %24 = sbr.rel (0) target = $region9
  $region8: #{global_plus_eps_forward.1} parent=0 // pred_region
    _
  $region9: #{global_plus_eps_forward.1} parent=0 // pred_fallthru
    _
  // Predicated region
  $region10: #{global_plus_eps_forward.1} parent=0 // pred_check
    _
  $region11: #{global_plus_eps_forward.1} parent=0 // pred_check_branch
    %26 = sbr.rel (0) target = $region13
  $region12: #{global_plus_eps_forward.1} parent=0 // pred_region
    _
  $region13: #{global_plus_eps_forward.1} parent=0 // pred_fallthru
    _
  // Predicated region
  $region14: #{global_plus_eps_forward.1} parent=0 // pred_check
    _
  $region15: #{global_plus_eps_forward.1} parent=0 // pred_check_branch
    %28 = sbr.rel (0) target = $region17
  $region16: #{global_plus_eps_forward.1} parent=0 // pred_region
    _
  $region17: #{global_plus_eps_forward.1} parent=0 // pred_fallthru
    _
  // Predicated region
  $region18: #{global_plus_eps_forward.1} parent=0 // pred_check
    _
  $region19: #{global_plus_eps_forward.1} parent=0 // pred_check_branch
    %30 = sbr.rel (0) target = $region21
  $region20: #{global_plus_eps_forward.1} parent=0 // pred_region
    _
  $region21: #{global_plus_eps_forward.1} parent=0 // pred_fallthru
    _
  // Predicated region
  $region22: #{global_plus_eps_forward.1} parent=0 // pred_check
    _
  $region23: #{global_plus_eps_forward.1} parent=0 // pred_check_branch
    %32 = sbr.rel (0) target = $region25
  $region24: #{global_plus_eps_forward.1} parent=0 // pred_region
    _
  $region25: #{global_plus_eps_forward.1} parent=0 // pred_fallthru
    _
  // Predicated region
  $region26: #{global_plus_eps_forward.1} parent=0 // pred_check
    _
  $region27: #{global_plus_eps_forward.1} parent=0 // pred_check_branch
    %34 = sbr.rel (0) target = $region29
  $region28: #{global_plus_eps_forward.1} parent=0 // pred_region
    _
  $region29: #{global_plus_eps_forward.1} parent=0 // pred_fallthru
    _
  // Predicated region
  $region30: #{global_plus_eps_forward.1} parent=0 // pred_check
    _
  $region31: #{global_plus_eps_forward.1} parent=0 // pred_check_branch
    %36 = sbr.rel (0) target = $region33
  $region32: #{global_plus_eps_forward.1} parent=0 // pred_region
    _
  $region33: #{global_plus_eps_forward.1} parent=0 // pred_fallthru
    _
  // Predicated region
  $region34: #{global_plus_eps_forward.1} parent=0 // pred_check
    _
  $region35: #{global_plus_eps_forward.1} parent=0 // pred_check_branch
    %38 = sbr.rel (0) target = $region37
  $region36: #{global_plus_eps_forward.1} parent=0 // pred_region
    _
  $region37: #{global_plus_eps_forward.1} parent=0 // pred_fallthru
    _
  // Predicated region
  $region38: #{global_plus_eps_forward.1} parent=0 // pred_check
    _
  $region39: #{global_plus_eps_forward.1} parent=0 // pred_check_branch
    %40 = sbr.rel (0) target = $region41
  $region40: #{global_plus_eps_forward.1} parent=0 // pred_region
    _
  $region41: #{global_plus_eps_forward.1} parent=0 // pred_fallthru
    _
  // Predicated region
  $region42: #{global_plus_eps_forward.1} parent=0 // pred_check
    _
  $region43: #{global_plus_eps_forward.1} parent=0 // pred_check_branch
    %42 = sbr.rel (0) target = $region45
  $region44: #{global_plus_eps_forward.1} parent=0 // pred_region
    _
  $region45: #{global_plus_eps_forward.1} parent=0 // pred_fallthru
    _
  // Predicated region
  $region46: #{global_plus_eps_forward.1} parent=0 // pred_check
    _
  $region47: #{global_plus_eps_forward.1} parent=0 // pred_check_branch
    %44 = sbr.rel (0) target = $region49
  $region48: #{global_plus_eps_forward.1} parent=0 // pred_region
    _
  $region49: #{global_plus_eps_forward.1} parent=0 // pred_fallthru
    _
  // Predicated region
  $region50: #{global_plus_eps_forward.1} parent=0 // pred_check
    _
  $region51: #{global_plus_eps_forward.1} parent=0 // pred_check_branch
    %46 = sbr.rel (0) target = $region53
  $region52: #{global_plus_eps_forward.1} parent=0 // pred_region
    _
  $region53: #{global_plus_eps_forward.1} parent=0 // pred_fallthru
    _
  // Predicated region
  $region54: #{global_plus_eps_forward.1} parent=0 // pred_check
    _
  $region55: #{global_plus_eps_forward.1} parent=0 // pred_check_branch
    %48 = sbr.rel (0) target = $region57
  $region56: #{global_plus_eps_forward.1} parent=0 // pred_region
    _
  $region57: #{global_plus_eps_forward.1} parent=0 // pred_fallthru
    _
  %v49 = vld [vmem:[%s4] sm:$0x3]
  %v50 = vld [vmem:[%s6] sm:$0x1]
  %v51 = vld [vmem:[%s8] sm:$0xff]
  %v52 = vld [vmem:[%s10] sm:$0x1]
  %v53 = vld [vmem:[%s11] sm:$0xff]
  %v54 = vld [vmem:[%s12] sm:$0x1]
  %v55 = vld [vmem:[%s13] sm:$0x1]
  %v56 = vld [vmem:[%s0] sm:$0xff]
  %v57 = vld [vmem:[%s0 + $0x8] sm:$0xff]
  %v58 = vld [vmem:[%s0 + $0x10] sm:$0xff]
  %v59 = vld [vmem:[%s0 + $0x18] sm:$0xff]
  %v60 = vld [vmem:[%s3] sm:$0x1f]
  %v61 = vld [vmem:[%s5] sm:$0x1]
  %v63 = vperm.slane %v61, 0
  %vm65 = vcmask 39936
  %v67 = vsel %vm65, %v56, 0
  %v70 = vsel %vm65, %v57, 0
  %v73 = vsel %vm65, %v58, 0
  %v76 = vsel %vm65, %v59, 0
  %vm78 = vcmask 1044480
  %v80 = vsel %vm78, %v60, 0
  %82 = vmatpush.msra.mxu0 0.0
  %83 = vmatpush.msra.mxu0 0.0
  %84 = vmatpush.msra.mxu0 0.0
  %85 = vmatpush.msra.mxu0 0.0
  %86 = vmatpush.msra.mxu0 0.0
  %87 = vmatpush.msra.mxu0 0.0
  %88 = vmatpush.msra.mxu0 0.0
  %89 = vmatpush.msra.mxu0 0.0
  %90 = vmatpush.msra.mxu0 0.0
  %91 = vmatpush.msra.mxu0 0.0
  %92 = vmatpush.msra.mxu0 0.0
  %93 = vmatpush.msra.mxu0 0.0
  %94 = vmatpush.msra.mxu0 0.0
  %95 = vmatpush.msra.mxu0 0.0
  %96 = vmatpush.msra.mxu0 0.0
  %97 = vmatpush.msra.mxu0 %v80
  %98 = vmatmul.f32.gmra.mxu0 %v67
  %v99 = vpop.f32.mrf.mxu0
  %v100 = vadd.f32 %v63, %v99
  %101 = vmatmul.f32.gmra.mxu0 %v70
  %v102 = vpop.f32.mrf.mxu0
  %v103 = vadd.f32 %v63, %v102
  %104 = vmatmul.f32.gmra.mxu0 %v73
  %v105 = vpop.f32.mrf.mxu0
  %v106 = vadd.f32 %v63, %v105
  %107 = vmatmul.f32.gmra.mxu0 %v76
  %v108 = vpop.f32.mrf.mxu0
  %v109 = vadd.f32 %v63, %v108
  %110 = vdwg.mxu0
  %v111 = vld [vmem:[%s7] sm:$0x1f]
  %v112 = vld [vmem:[%s9] sm:$0x1]
  %v114 = vperm.slane %v112, 0
  %v117 = vsel %vm78, %v111, 0
  %119 = vmatpush.msra.mxu0 0.0
  %120 = vmatpush.msra.mxu0 0.0
  %121 = vmatpush.msra.mxu0 0.0
  %122 = vmatpush.msra.mxu0 0.0
  %123 = vmatpush.msra.mxu0 0.0
  %124 = vmatpush.msra.mxu0 0.0
  %125 = vmatpush.msra.mxu0 0.0
  %126 = vmatpush.msra.mxu0 0.0
  %127 = vmatpush.msra.mxu0 0.0
  %128 = vmatpush.msra.mxu0 0.0
  %129 = vmatpush.msra.mxu0 0.0
  %130 = vmatpush.msra.mxu0 0.0
  %131 = vmatpush.msra.mxu0 0.0
  %132 = vmatpush.msra.mxu0 0.0
  %133 = vmatpush.msra.mxu0 0.0
  %134 = vmatpush.msra.mxu0 %v117
  %135 = vmatmul.f32.gmra.mxu0 %v67
  %v136 = vpop.f32.mrf.mxu0
  %v137 = vadd.f32 %v114, %v136
  %138 = vmatmul.f32.gmra.mxu0 %v70
  %v139 = vpop.f32.mrf.mxu0
  %v140 = vadd.f32 %v114, %v139
  %141 = vmatmul.f32.gmra.mxu0 %v73
  %v142 = vpop.f32.mrf.mxu0
  %v143 = vadd.f32 %v114, %v142
  %144 = vmatmul.f32.gmra.mxu0 %v76
  %v145 = vpop.f32.mrf.mxu0
  %v146 = vadd.f32 %v114, %v145
  %147 = vdwg.mxu0
  %v148 = vld [vmem:[%s1] sm:$0xf]
  %v149 = vld [vmem:[%s2] sm:$0xf]
  %v151 = vperm.slane %v50, 0
  %vm153 = vcmask 15360
  %v155 = vsel %vm153, %v148, 0
  %vm157 = vcmask 1041408
  %v159 = vsel %vm157, %v49, 0
  %161 = vmatpush.msra.mxu0 0.0
  %162 = vmatpush.msra.mxu0 0.0
  %163 = vmatpush.msra.mxu0 0.0
  %164 = vmatpush.msra.mxu0 0.0
  %165 = vmatpush.msra.mxu0 0.0
  %166 = vmatpush.msra.mxu0 0.0
  %167 = vmatpush.msra.mxu0 0.0
  %168 = vmatpush.msra.mxu0 0.0
  %169 = vmatpush.msra.mxu0 0.0
  %170 = vmatpush.msra.mxu0 0.0
  %171 = vmatpush.msra.mxu0 0.0
  %172 = vmatpush.msra.mxu0 0.0
  %173 = vmatpush.msra.mxu0 0.0
  %174 = vmatpush.msra.mxu0 0.0
  %175 = vmatpush.msra.mxu0 0.0
  %176 = vmatpush.msra.mxu0 %v159
  %177 = vmatmul.f32.gmra.mxu0 %v155
  %v178 = vpop.f32.mrf.mxu0
  %v179 = vadd.f32 %v151, %v178
  %180 = vdwg.mxu0
  %v181 = vadd.f32 %v100, %v179
  %v182 = vxor.u32 %v181, 2147483648
  %v183 = vmul.f32 %v182, 1.442695
  %v184 = vpow.pop %v183
  %v185 = vadd.f32 %v184, 1.0
  %v186 = vrcp.pop %v185
  %v187 = vmul.f32 %v185, %v186
  %v188 = vsub.f32 1.0, %v187
  %v189 = vmul.f32 %v186, %v188
  %v190 = vadd.f32 %v186, %v189
  %vm191 = vweird.f32 %v185
  %vm192 = vweird.f32 %v186
  %vm193 = vmor %vm191, %vm192
  %v194 = vsel %vm193, %v186, %v190
  %v195 = vand.u32 2147483647, %v185
  %vm196 = vcmp.eq.f32.partialorder %v195, 8.507059e+37
  %v197 = vand.u32 %v185, 2147483648
  %v198 = vor.u32 1.1754944e-38, %v197
  %v199 = vsel %vm196, %v198, %v194
  %v200 = vmul.f32 1.0, %v199
  %202 = vrot.lane.b32.xlu0 %v179, 124
  %v203 = vpop.permute.xlu0 %202
  %v205 = vmul.f32 %v200, %v203
  %207 = vrot.lane.b32.xlu0 %v205, 4
  %v208 = vpop.permute.xlu0 %207
  %v210 = vadd.f32 %v100, %v208
  %v211 = vtanh.pop %v210
  %v212 = vsub.f32 1.0, %v200
  %214 = vrot.lane.b32.xlu0 %v211, 126
  %v215 = vpop.permute.xlu0 %214
  %v217 = vmul.f32 %v212, %v215
  %218 = vrot.lane.b32.xlu0 %v148, 2
  %v219 = vpop.permute.xlu0 %218
  %v221 = vmul.f32 %v200, %v219
  %v222 = vadd.f32 %v217, %v221
  %v224 = vperm.slane %v52, 0
  %vm226 = vcmask 64512
  %v228 = vsel %vm226, %v149, 0
  %230 = vmatpush.msra.mxu0 0.0
  %231 = vmatpush.msra.mxu0 0.0
  %232 = vmatpush.msra.mxu0 0.0
  %233 = vmatpush.msra.mxu0 0.0
  %234 = vmatpush.msra.mxu0 0.0
  %235 = vmatpush.msra.mxu0 0.0
  %236 = vmatpush.msra.mxu0 0.0
  %237 = vmatpush.msra.mxu0 0.0
  %238 = vmatpush.msra.mxu0 0.0
  %239 = vmatpush.msra.mxu0 0.0
  %240 = vmatpush.msra.mxu0 0.0
  %241 = vmatpush.msra.mxu0 0.0
  %242 = vmatpush.msra.mxu0 0.0
  %243 = vmatpush.msra.mxu0 0.0
  %244 = vmatpush.msra.mxu0 0.0
  %245 = vmatpush.msra.mxu0 %v51
  %246 = vmatmul.f32.gmra.mxu0 %v228
  %v247 = vpop.f32.mrf.mxu0
  %v248 = vadd.f32 %v224, %v247
  %249 = vdwg.mxu0
  %v250 = vadd.f32 %v137, %v248
  %v251 = vxor.u32 %v250, 2147483648
  %v252 = vmul.f32 %v251, 1.442695
  %v253 = vpow.pop %v252
  %v254 = vadd.f32 %v253, 1.0
  %v255 = vrcp.pop %v254
  %v256 = vmul.f32 %v254, %v255
  %v257 = vsub.f32 1.0, %v256
  %v258 = vmul.f32 %v255, %v257
  %v259 = vadd.f32 %v255, %v258
  %vm260 = vweird.f32 %v254
  %vm261 = vweird.f32 %v255
  %vm262 = vmor %vm260, %vm261
  %v263 = vsel %vm262, %v255, %v259
  %v264 = vand.u32 2147483647, %v254
  %vm265 = vcmp.eq.f32.partialorder %v264, 8.507059e+37
  %v266 = vand.u32 %v254, 2147483648
  %v267 = vor.u32 1.1754944e-38, %v266
  %v268 = vsel %vm265, %v267, %v263
  %v269 = vmul.f32 1.0, %v268
  %271 = vrot.lane.b32.xlu0 %v248, 112
  %v272 = vpop.permute.xlu0 %271
  %v274 = vmul.f32 %v269, %v272
  %276 = vrot.lane.b32.xlu0 %v274, 16
  %v277 = vpop.permute.xlu0 %276
  %v279 = vadd.f32 %v137, %v277
  %v280 = vtanh.pop %v279
  %v281 = vsub.f32 1.0, %v269
  %283 = vrot.lane.b32.xlu0 %v280, 120
  %v284 = vpop.permute.xlu0 %283
  %v286 = vmul.f32 %v281, %v284
  %287 = vrot.lane.b32.xlu0 %v149, 8
  %v288 = vpop.permute.xlu0 %287
  %v290 = vmul.f32 %v269, %v288
  %v291 = vadd.f32 %v286, %v290
  %v292 = vsub.f32 0.0, %v222
  %v293 = vmul.f32 %v292, 1.442695
  %v294 = vpow.pop %v293
  %v296 = vperm.slane %v55, 0
  %298 = vrot.lane.b32.xlu0 %v296, 2
  %v299 = vpop.permute.xlu0 %298
  %v301 = vmul.f32 %v294, %v299
  %vm302 = vcmask 27664
  %v303 = vsel %vm302, %v301, 0.0
  %v304 = vrot.slane %v303, 4
  %v305 = vadd.f32 %v303, %v304
  %v306 = vrot.slane %v305, 2
  %v307 = vadd.f32 %v305, %v306
  %v308 = vrot.slane %v307, 1
  %v309 = vadd.f32 %v307, %v308
  %v310 = vrcp.pop 4.0
  %v311 = vmul.f32 4.0, %v310
  %v312 = vsub.f32 1.0, %v311
  %v313 = vmul.f32 %v310, %v312
  %v314 = vadd.f32 %v310, %v313
  %vm315 = vweird.f32 %v310
  %v316 = vsel %vm315, %v310, %v314
  %v317 = vmul.f32 %v309, %v316
  %v319 = vperm.slane %v54, 0
  %322 = vrot.lane.b32.xlu0 %v291, 120
  %v323 = vpop.permute.xlu0 %322
  %v324 = vsel %vm226, %v323, 0
  %326 = vmatpush.msra.mxu0 0.0
  %327 = vmatpush.msra.mxu0 0.0
  %328 = vmatpush.msra.mxu0 0.0
  %329 = vmatpush.msra.mxu0 0.0
  %330 = vmatpush.msra.mxu0 0.0
  %331 = vmatpush.msra.mxu0 0.0
  %332 = vmatpush.msra.mxu0 0.0
  %333 = vmatpush.msra.mxu0 0.0
  %334 = vmatpush.msra.mxu0 0.0
  %335 = vmatpush.msra.mxu0 0.0
  %336 = vmatpush.msra.mxu0 0.0
  %337 = vmatpush.msra.mxu0 0.0
  %338 = vmatpush.msra.mxu0 0.0
  %339 = vmatpush.msra.mxu0 0.0
  %340 = vmatpush.msra.mxu0 0.0
  %341 = vmatpush.msra.mxu0 %v53
  %342 = vmatmul.f32.gmra.mxu0 %v324
  %v343 = vpop.f32.mrf.mxu0
  %v344 = vadd.f32 %v319, %v343
  %345 = vdwg.mxu0
  %v346 = vsub.f32 0.0, %v344
  %v347 = vmul.f32 %v346, 1.442695
  %v348 = vpow.pop %v347
  %v349 = vmul.f32 %v348, %v296
  %351 = vrot.lane.b32.xlu0 %v349, 2
  %v352 = vpop.permute.xlu0 %351
  %v354 = vadd.f32 %v317, %v352
  %356 = vrot.lane.b32.xlu0 %v354, 126
  %v357 = vpop.permute.xlu0 %356
  %vm359 = vcmask 11264
  %360 = vst.msk [vmem:[%s15] sm:$0xf] %vm359, %v357
  %362 = vrot.lane.b32.xlu0 %v344, 126
  %v363 = vpop.permute.xlu0 %362
  %vm365 = vcmask 35840
  %366 = vst.msk [vmem:[%s14] sm:$0xf] %vm365, %v363
  %368 = vrot.lane.b32.xlu0 %v222, 126
  %v369 = vpop.permute.xlu0 %368
  %v370 = vsel %vm153, %v369, 0
  %372 = vmatpush.msra.mxu0 0.0
  %373 = vmatpush.msra.mxu0 0.0
  %374 = vmatpush.msra.mxu0 0.0
  %375 = vmatpush.msra.mxu0 0.0
  %376 = vmatpush.msra.mxu0 0.0
  %377 = vmatpush.msra.mxu0 0.0
  %378 = vmatpush.msra.mxu0 0.0
  %379 = vmatpush.msra.mxu0 0.0
  %380 = vmatpush.msra.mxu0 0.0
  %381 = vmatpush.msra.mxu0 0.0
  %382 = vmatpush.msra.mxu0 0.0
  %383 = vmatpush.msra.mxu0 0.0
  %384 = vmatpush.msra.mxu0 0.0
  %385 = vmatpush.msra.mxu0 0.0
  %386 = vmatpush.msra.mxu0 0.0
  %387 = vmatpush.msra.mxu0 %v159
  %388 = vmatmul.f32.gmra.mxu0 %v370
  %v389 = vpop.f32.mrf.mxu0
  %v390 = vadd.f32 %v151, %v389
  %391 = vdwg.mxu0
  %v393 = vrot.slane %v390, 4
  %v395 = vadd.f32 %v100, %v393
  %v396 = vxor.u32 %v395, 2147483648
  %v397 = vmul.f32 %v396, 1.442695
  %v398 = vpow.pop %v397
  %v399 = vadd.f32 %v398, 1.0
  %v400 = vrcp.pop %v399
  %v401 = vmul.f32 %v399, %v400
  %v402 = vsub.f32 1.0, %v401
  %v403 = vmul.f32 %v400, %v402
  %v404 = vadd.f32 %v400, %v403
  %vm405 = vweird.f32 %v399
  %vm406 = vweird.f32 %v400
  %vm407 = vmor %vm405, %vm406
  %v408 = vsel %vm407, %v400, %v404
  %v409 = vand.u32 2147483647, %v399
  %vm410 = vcmp.eq.f32.partialorder %v409, 8.507059e+37
  %v411 = vand.u32 %v399, 2147483648
  %v412 = vor.u32 1.1754944e-38, %v411
  %v413 = vsel %vm410, %v412, %v408
  %v414 = vmul.f32 1.0, %v413
  %415 = vrot.lane.b32.xlu0 %v393, 124
  %v416 = vpop.permute.xlu0 %415
  %v418 = vmul.f32 %v414, %v416
  %420 = vrot.lane.b32.xlu0 %v418, 4
  %v421 = vpop.permute.xlu0 %420
  %v423 = vadd.f32 %v100, %v421
  %v424 = vtanh.pop %v423
  %v425 = vsub.f32 1.0, %v414
  %427 = vrot.lane.b32.xlu0 %v424, 126
  %v428 = vpop.permute.xlu0 %427
  %v430 = vmul.f32 %v425, %v428
  %v431 = vrot.slane %v222, 4
  %v433 = vmul.f32 %v414, %v431
  %v434 = vadd.f32 %v430, %v433
  %435 = vmatpush.msra.mxu0 0.0
  %436 = vmatpush.msra.mxu0 0.0
  %437 = vmatpush.msra.mxu0 0.0
  %438 = vmatpush.msra.mxu0 0.0
  %439 = vmatpush.msra.mxu0 0.0
  %440 = vmatpush.msra.mxu0 0.0
  %441 = vmatpush.msra.mxu0 0.0
  %442 = vmatpush.msra.mxu0 0.0
  %443 = vmatpush.msra.mxu0 0.0
  %444 = vmatpush.msra.mxu0 0.0
  %445 = vmatpush.msra.mxu0 0.0
  %446 = vmatpush.msra.mxu0 0.0
  %447 = vmatpush.msra.mxu0 0.0
  %448 = vmatpush.msra.mxu0 0.0
  %449 = vmatpush.msra.mxu0 0.0
  %450 = vmatpush.msra.mxu0 %v51
  %451 = vmatmul.f32.gmra.mxu0 %v324
  %v452 = vpop.f32.mrf.mxu0
  %v453 = vadd.f32 %v224, %v452
  %454 = vdwg.mxu0
  %v456 = vrot.slane %v453, 4
  %v458 = vadd.f32 %v137, %v456
  %v459 = vxor.u32 %v458, 2147483648
  %v460 = vmul.f32 %v459, 1.442695
  %v461 = vpow.pop %v460
  %v462 = vadd.f32 %v461, 1.0
  %v463 = vrcp.pop %v462
  %v464 = vmul.f32 %v462, %v463
  %v465 = vsub.f32 1.0, %v464
  %v466 = vmul.f32 %v463, %v465
  %v467 = vadd.f32 %v463, %v466
  %vm468 = vweird.f32 %v462
  %vm469 = vweird.f32 %v463
  %vm470 = vmor %vm468, %vm469
  %v471 = vsel %vm470, %v463, %v467
  %v472 = vand.u32 2147483647, %v462
  %vm473 = vcmp.eq.f32.partialorder %v472, 8.507059e+37
  %v474 = vand.u32 %v462, 2147483648
  %v475 = vor.u32 1.1754944e-38, %v474
  %v476 = vsel %vm473, %v475, %v471
  %v477 = vmul.f32 1.0, %v476
  %478 = vrot.lane.b32.xlu0 %v456, 112
  %v479 = vpop.permute.xlu0 %478
  %v481 = vmul.f32 %v477, %v479
  %483 = vrot.lane.b32.xlu0 %v481, 16
  %v484 = vpop.permute.xlu0 %483
  %v486 = vadd.f32 %v137, %v484
  %v487 = vtanh.pop %v486
  %v488 = vsub.f32 1.0, %v477
  %490 = vrot.lane.b32.xlu0 %v487, 120
  %v491 = vpop.permute.xlu0 %490
  %v493 = vmul.f32 %v488, %v491
  %v494 = vrot.slane %v291, 4
  %v496 = vmul.f32 %v477, %v494
  %v497 = vadd.f32 %v493, %v496
  %v498 = vsub.f32 0.0, %v434
  %v499 = vmul.f32 %v498, 1.442695
  %v500 = vpow.pop %v499
  %v501 = vmul.f32 %v500, %v299
  %v503 = vrot.slane %v501, 4
  %v505 = vsel %vm302, %v503, 0.0
  %v506 = vrot.slane %v505, 4
  %v507 = vadd.f32 %v505, %v506
  %v508 = vrot.slane %v507, 2
  %v509 = vadd.f32 %v507, %v508
  %v510 = vrot.slane %v509, 1
  %v511 = vadd.f32 %v509, %v510
  %v512 = vmul.f32 %v511, %v316
  %v514 = vrot.slane %v497, 4
  %515 = vrot.lane.b32.xlu0 %v514, 120
  %v516 = vpop.permute.xlu0 %515
  %v517 = vsel %vm226, %v516, 0
  %519 = vmatpush.msra.mxu0 0.0
  %520 = vmatpush.msra.mxu0 0.0
  %521 = vmatpush.msra.mxu0 0.0
  %522 = vmatpush.msra.mxu0 0.0
  %523 = vmatpush.msra.mxu0 0.0
  %524 = vmatpush.msra.mxu0 0.0
  %525 = vmatpush.msra.mxu0 0.0
  %526 = vmatpush.msra.mxu0 0.0
  %527 = vmatpush.msra.mxu0 0.0
  %528 = vmatpush.msra.mxu0 0.0
  %529 = vmatpush.msra.mxu0 0.0
  %530 = vmatpush.msra.mxu0 0.0
  %531 = vmatpush.msra.mxu0 0.0
  %532 = vmatpush.msra.mxu0 0.0
  %533 = vmatpush.msra.mxu0 0.0
  %534 = vmatpush.msra.mxu0 %v53
  %535 = vmatmul.f32.gmra.mxu0 %v517
  %v536 = vpop.f32.mrf.mxu0
  %v537 = vadd.f32 %v319, %v536
  %538 = vdwg.mxu0
  %v539 = vsub.f32 0.0, %v537
  %v540 = vmul.f32 %v539, 1.442695
  %v541 = vpow.pop %v540
  %v542 = vmul.f32 %v541, %v296
  %544 = vrot.lane.b32.xlu0 %v542, 2
  %v545 = vpop.permute.xlu0 %544
  %v547 = vadd.f32 %v512, %v545
  %548 = vst.msk [vmem:[%s15] sm:$0xf] %vm302, %v547
  %550 = vrot.lane.b32.xlu0 %v537, 3
  %v551 = vpop.permute.xlu0 %550
  %vm553 = vcmask 76840
  %554 = vst.msk [vmem:[%s14] sm:$0xf] %vm553, %v551
  %v556 = vrot.slane %v434, 4
  %557 = vrot.lane.b32.xlu0 %v556, 126
  %v558 = vpop.permute.xlu0 %557
  %v559 = vsel %vm153, %v558, 0
  %561 = vmatpush.msra.mxu0 0.0
  %562 = vmatpush.msra.mxu0 0.0
  %563 = vmatpush.msra.mxu0 0.0
  %564 = vmatpush.msra.mxu0 0.0
  %565 = vmatpush.msra.mxu0 0.0
  %566 = vmatpush.msra.mxu0 0.0
  %567 = vmatpush.msra.mxu0 0.0
  %568 = vmatpush.msra.mxu0 0.0
  %569 = vmatpush.msra.mxu0 0.0
  %570 = vmatpush.msra.mxu0 0.0
  %571 = vmatpush.msra.mxu0 0.0
  %572 = vmatpush.msra.mxu0 0.0
  %573 = vmatpush.msra.mxu0 0.0
  %574 = vmatpush.msra.mxu0 0.0
  %575 = vmatpush.msra.mxu0 0.0
  %576 = vmatpush.msra.mxu0 %v159
  %577 = vmatmul.f32.gmra.mxu0 %v559
  %v578 = vpop.f32.mrf.mxu0
  %v579 = vadd.f32 %v151, %v578
  %580 = vdwg.mxu0
  %v581 = vadd.f32 %v103, %v579
  %v582 = vxor.u32 %v581, 2147483648
  %v583 = vmul.f32 %v582, 1.442695
  %v584 = vpow.pop %v583
  %v585 = vadd.f32 %v584, 1.0
  %v586 = vrcp.pop %v585
  %v587 = vmul.f32 %v585, %v586
  %v588 = vsub.f32 1.0, %v587
  %v589 = vmul.f32 %v586, %v588
  %v590 = vadd.f32 %v586, %v589
  %vm591 = vweird.f32 %v585
  %vm592 = vweird.f32 %v586
  %vm593 = vmor %vm591, %vm592
  %v594 = vsel %vm593, %v586, %v590
  %v595 = vand.u32 2147483647, %v585
  %vm596 = vcmp.eq.f32.partialorder %v595, 8.507059e+37
  %v597 = vand.u32 %v585, 2147483648
  %v598 = vor.u32 1.1754944e-38, %v597
  %v599 = vsel %vm596, %v598, %v594
  %v600 = vmul.f32 1.0, %v599
  %602 = vrot.lane.b32.xlu0 %v579, 124
  %v603 = vpop.permute.xlu0 %602
  %v605 = vmul.f32 %v600, %v603
  %607 = vrot.lane.b32.xlu0 %v605, 4
  %v608 = vpop.permute.xlu0 %607
  %v610 = vadd.f32 %v103, %v608
  %v611 = vtanh.pop %v610
  %v612 = vsub.f32 1.0, %v600
  %614 = vrot.lane.b32.xlu0 %v611, 126
  %v615 = vpop.permute.xlu0 %614
  %v617 = vmul.f32 %v612, %v615
  %v619 = vmul.f32 %v600, %v556
  %v620 = vadd.f32 %v617, %v619
  %621 = vmatpush.msra.mxu0 0.0
  %622 = vmatpush.msra.mxu0 0.0
  %623 = vmatpush.msra.mxu0 0.0
  %624 = vmatpush.msra.mxu0 0.0
  %625 = vmatpush.msra.mxu0 0.0
  %626 = vmatpush.msra.mxu0 0.0
  %627 = vmatpush.msra.mxu0 0.0
  %628 = vmatpush.msra.mxu0 0.0
  %629 = vmatpush.msra.mxu0 0.0
  %630 = vmatpush.msra.mxu0 0.0
  %631 = vmatpush.msra.mxu0 0.0
  %632 = vmatpush.msra.mxu0 0.0
  %633 = vmatpush.msra.mxu0 0.0
  %634 = vmatpush.msra.mxu0 0.0
  %635 = vmatpush.msra.mxu0 0.0
  %636 = vmatpush.msra.mxu0 %v51
  %637 = vmatmul.f32.gmra.mxu0 %v517
  %v638 = vpop.f32.mrf.mxu0
  %v639 = vadd.f32 %v224, %v638
  %640 = vdwg.mxu0
  %v641 = vadd.f32 %v140, %v639
  %v642 = vxor.u32 %v641, 2147483648
  %v643 = vmul.f32 %v642, 1.442695
  %v644 = vpow.pop %v643
  %v645 = vadd.f32 %v644, 1.0
  %v646 = vrcp.pop %v645
  %v647 = vmul.f32 %v645, %v646
  %v648 = vsub.f32 1.0, %v647
  %v649 = vmul.f32 %v646, %v648
  %v650 = vadd.f32 %v646, %v649
  %vm651 = vweird.f32 %v645
  %vm652 = vweird.f32 %v646
  %vm653 = vmor %vm651, %vm652
  %v654 = vsel %vm653, %v646, %v650
  %v655 = vand.u32 2147483647, %v645
  %vm656 = vcmp.eq.f32.partialorder %v655, 8.507059e+37
  %v657 = vand.u32 %v645, 2147483648
  %v658 = vor.u32 1.1754944e-38, %v657
  %v659 = vsel %vm656, %v658, %v654
  %v660 = vmul.f32 1.0, %v659
  %662 = vrot.lane.b32.xlu0 %v639, 112
  %v663 = vpop.permute.xlu0 %662
  %v665 = vmul.f32 %v660, %v663
  %667 = vrot.lane.b32.xlu0 %v665, 16
  %v668 = vpop.permute.xlu0 %667
  %v670 = vadd.f32 %v140, %v668
  %v671 = vtanh.pop %v670
  %v672 = vsub.f32 1.0, %v660
  %674 = vrot.lane.b32.xlu0 %v671, 120
  %v675 = vpop.permute.xlu0 %674
  %v677 = vmul.f32 %v672, %v675
  %v679 = vmul.f32 %v660, %v514
  %v680 = vadd.f32 %v677, %v679
  %v681 = vsub.f32 0.0, %v620
  %v682 = vmul.f32 %v681, 1.442695
  %v683 = vpow.pop %v682
  %v684 = vmul.f32 %v683, %v299
  %v685 = vsel %vm302, %v684, 0.0
  %v686 = vrot.slane %v685, 4
  %v687 = vadd.f32 %v685, %v686
  %v688 = vrot.slane %v687, 2
  %v689 = vadd.f32 %v687, %v688
  %v690 = vrot.slane %v689, 1
  %v691 = vadd.f32 %v689, %v690
  %v692 = vmul.f32 %v691, %v316
  %694 = vrot.lane.b32.xlu0 %v680, 120
  %v695 = vpop.permute.xlu0 %694
  %v696 = vsel %vm226, %v695, 0
  %698 = vmatpush.msra.mxu0 0.0
  %699 = vmatpush.msra.mxu0 0.0
  %700 = vmatpush.msra.mxu0 0.0
  %701 = vmatpush.msra.mxu0 0.0
  %702 = vmatpush.msra.mxu0 0.0
  %703 = vmatpush.msra.mxu0 0.0
  %704 = vmatpush.msra.mxu0 0.0
  %705 = vmatpush.msra.mxu0 0.0
  %706 = vmatpush.msra.mxu0 0.0
  %707 = vmatpush.msra.mxu0 0.0
  %708 = vmatpush.msra.mxu0 0.0
  %709 = vmatpush.msra.mxu0 0.0
  %710 = vmatpush.msra.mxu0 0.0
  %711 = vmatpush.msra.mxu0 0.0
  %712 = vmatpush.msra.mxu0 0.0
  %713 = vmatpush.msra.mxu0 %v53
  %714 = vmatmul.f32.gmra.mxu0 %v696
  %v715 = vpop.f32.mrf.mxu0
  %v716 = vadd.f32 %v319, %v715
  %717 = vdwg.mxu0
  %v718 = vsub.f32 0.0, %v716
  %v719 = vmul.f32 %v718, 1.442695
  %v720 = vpow.pop %v719
  %v721 = vmul.f32 %v720, %v296
  %723 = vrot.lane.b32.xlu0 %v721, 2
  %v724 = vpop.permute.xlu0 %723
  %v726 = vadd.f32 %v692, %v724
  %728 = vrot.lane.b32.xlu0 %v726, 2
  %v729 = vpop.permute.xlu0 %728
  %vm731 = vcmask 44064
  %732 = vst.msk [vmem:[%s15] sm:$0xf] %vm731, %v729
  %734 = vrot.lane.b32.xlu0 %v716, 8
  %v735 = vpop.permute.xlu0 %734
  %vm737 = vcmask 117840
  %738 = vst.msk [vmem:[%s14] sm:$0xf] %vm737, %v735
  %740 = vrot.lane.b32.xlu0 %v620, 126
  %v741 = vpop.permute.xlu0 %740
  %v742 = vsel %vm153, %v741, 0
  %744 = vmatpush.msra.mxu0 0.0
  %745 = vmatpush.msra.mxu0 0.0
  %746 = vmatpush.msra.mxu0 0.0
  %747 = vmatpush.msra.mxu0 0.0
  %748 = vmatpush.msra.mxu0 0.0
  %749 = vmatpush.msra.mxu0 0.0
  %750 = vmatpush.msra.mxu0 0.0
  %751 = vmatpush.msra.mxu0 0.0
  %752 = vmatpush.msra.mxu0 0.0
  %753 = vmatpush.msra.mxu0 0.0
  %754 = vmatpush.msra.mxu0 0.0
  %755 = vmatpush.msra.mxu0 0.0
  %756 = vmatpush.msra.mxu0 0.0
  %757 = vmatpush.msra.mxu0 0.0
  %758 = vmatpush.msra.mxu0 0.0
  %759 = vmatpush.msra.mxu0 %v159
  %760 = vmatmul.f32.gmra.mxu0 %v742
  %v761 = vpop.f32.mrf.mxu0
  %v762 = vadd.f32 %v151, %v761
  %763 = vdwg.mxu0
  %v765 = vrot.slane %v762, 4
  %v767 = vadd.f32 %v103, %v765
  %v768 = vxor.u32 %v767, 2147483648
  %v769 = vmul.f32 %v768, 1.442695
  %v770 = vpow.pop %v769
  %v771 = vadd.f32 %v770, 1.0
  %v772 = vrcp.pop %v771
  %v773 = vmul.f32 %v771, %v772
  %v774 = vsub.f32 1.0, %v773
  %v775 = vmul.f32 %v772, %v774
  %v776 = vadd.f32 %v772, %v775
  %vm777 = vweird.f32 %v771
  %vm778 = vweird.f32 %v772
  %vm779 = vmor %vm777, %vm778
  %v780 = vsel %vm779, %v772, %v776
  %v781 = vand.u32 2147483647, %v771
  %vm782 = vcmp.eq.f32.partialorder %v781, 8.507059e+37
  %v783 = vand.u32 %v771, 2147483648
  %v784 = vor.u32 1.1754944e-38, %v783
  %v785 = vsel %vm782, %v784, %v780
  %v786 = vmul.f32 1.0, %v785
  %787 = vrot.lane.b32.xlu0 %v765, 124
  %v788 = vpop.permute.xlu0 %787
  %v790 = vmul.f32 %v786, %v788
  %792 = vrot.lane.b32.xlu0 %v790, 4
  %v793 = vpop.permute.xlu0 %792
  %v795 = vadd.f32 %v103, %v793
  %v796 = vtanh.pop %v795
  %v797 = vsub.f32 1.0, %v786
  %799 = vrot.lane.b32.xlu0 %v796, 126
  %v800 = vpop.permute.xlu0 %799
  %v802 = vmul.f32 %v797, %v800
  %v803 = vrot.slane %v620, 4
  %v805 = vmul.f32 %v786, %v803
  %v806 = vadd.f32 %v802, %v805
  %807 = vmatpush.msra.mxu0 0.0
  %808 = vmatpush.msra.mxu0 0.0
  %809 = vmatpush.msra.mxu0 0.0
  %810 = vmatpush.msra.mxu0 0.0
  %811 = vmatpush.msra.mxu0 0.0
  %812 = vmatpush.msra.mxu0 0.0
  %813 = vmatpush.msra.mxu0 0.0
  %814 = vmatpush.msra.mxu0 0.0
  %815 = vmatpush.msra.mxu0 0.0
  %816 = vmatpush.msra.mxu0 0.0
  %817 = vmatpush.msra.mxu0 0.0
  %818 = vmatpush.msra.mxu0 0.0
  %819 = vmatpush.msra.mxu0 0.0
  %820 = vmatpush.msra.mxu0 0.0
  %821 = vmatpush.msra.mxu0 0.0
  %822 = vmatpush.msra.mxu0 %v51
  %823 = vmatmul.f32.gmra.mxu0 %v696
  %v824 = vpop.f32.mrf.mxu0
  %v825 = vadd.f32 %v224, %v824
  %826 = vdwg.mxu0
  %v828 = vrot.slane %v825, 4
  %v830 = vadd.f32 %v140, %v828
  %v831 = vxor.u32 %v830, 2147483648
  %v832 = vmul.f32 %v831, 1.442695
  %v833 = vpow.pop %v832
  %v834 = vadd.f32 %v833, 1.0
  %v835 = vrcp.pop %v834
  %v836 = vmul.f32 %v834, %v835
  %v837 = vsub.f32 1.0, %v836
  %v838 = vmul.f32 %v835, %v837
  %v839 = vadd.f32 %v835, %v838
  %vm840 = vweird.f32 %v834
  %vm841 = vweird.f32 %v835
  %vm842 = vmor %vm840, %vm841
  %v843 = vsel %vm842, %v835, %v839
  %v844 = vand.u32 2147483647, %v834
  %vm845 = vcmp.eq.f32.partialorder %v844, 8.507059e+37
  %v846 = vand.u32 %v834, 2147483648
  %v847 = vor.u32 1.1754944e-38, %v846
  %v848 = vsel %vm845, %v847, %v843
  %v849 = vmul.f32 1.0, %v848
  %850 = vrot.lane.b32.xlu0 %v828, 112
  %v851 = vpop.permute.xlu0 %850
  %v853 = vmul.f32 %v849, %v851
  %855 = vrot.lane.b32.xlu0 %v853, 16
  %v856 = vpop.permute.xlu0 %855
  %v858 = vadd.f32 %v140, %v856
  %v859 = vtanh.pop %v858
  %v860 = vsub.f32 1.0, %v849
  %862 = vrot.lane.b32.xlu0 %v859, 120
  %v863 = vpop.permute.xlu0 %862
  %v865 = vmul.f32 %v860, %v863
  %v866 = vrot.slane %v680, 4
  %v868 = vmul.f32 %v849, %v866
  %v869 = vadd.f32 %v865, %v868
  %v870 = vsub.f32 0.0, %v806
  %v871 = vmul.f32 %v870, 1.442695
  %v872 = vpow.pop %v871
  %v873 = vmul.f32 %v872, %v299
  %v875 = vrot.slane %v873, 4
  %v877 = vsel %vm302, %v875, 0.0
  %v878 = vrot.slane %v877, 4
  %v879 = vadd.f32 %v877, %v878
  %v880 = vrot.slane %v879, 2
  %v881 = vadd.f32 %v879, %v880
  %v882 = vrot.slane %v881, 1
  %v883 = vadd.f32 %v881, %v882
  %v884 = vmul.f32 %v883, %v316
  %v886 = vrot.slane %v869, 4
  %887 = vrot.lane.b32.xlu0 %v886, 120
  %v888 = vpop.permute.xlu0 %887
  %v889 = vsel %vm226, %v888, 0
  %891 = vmatpush.msra.mxu0 0.0
  %892 = vmatpush.msra.mxu0 0.0
  %893 = vmatpush.msra.mxu0 0.0
  %894 = vmatpush.msra.mxu0 0.0
  %895 = vmatpush.msra.mxu0 0.0
  %896 = vmatpush.msra.mxu0 0.0
  %897 = vmatpush.msra.mxu0 0.0
  %898 = vmatpush.msra.mxu0 0.0
  %899 = vmatpush.msra.mxu0 0.0
  %900 = vmatpush.msra.mxu0 0.0
  %901 = vmatpush.msra.mxu0 0.0
  %902 = vmatpush.msra.mxu0 0.0
  %903 = vmatpush.msra.mxu0 0.0
  %904 = vmatpush.msra.mxu0 0.0
  %905 = vmatpush.msra.mxu0 0.0
  %906 = vmatpush.msra.mxu0 %v53
  %907 = vmatmul.f32.gmra.mxu0 %v889
  %v908 = vpop.f32.mrf.mxu0
  %v909 = vadd.f32 %v319, %v908
  %910 = vdwg.mxu0
  %v911 = vsub.f32 0.0, %v909
  %v912 = vmul.f32 %v911, 1.442695
  %v913 = vpow.pop %v912
  %v914 = vmul.f32 %v913, %v296
  %916 = vrot.lane.b32.xlu0 %v914, 2
  %v917 = vpop.permute.xlu0 %916
  %v919 = vadd.f32 %v884, %v917
  %921 = vrot.lane.b32.xlu0 %v919, 4
  %v922 = vpop.permute.xlu0 %921
  %vm924 = vcmask 60464
  %925 = vst.msk [vmem:[%s15] sm:$0xf] %vm924, %v922
  %927 = vrot.lane.b32.xlu0 %v909, 13
  %v928 = vpop.permute.xlu0 %927
  %vm930 = vcmask 158840
  %931 = vst.msk [vmem:[%s14] sm:$0xf] %vm930, %v928
  %v933 = vrot.slane %v806, 4
  %934 = vrot.lane.b32.xlu0 %v933, 126
  %v935 = vpop.permute.xlu0 %934
  %v936 = vsel %vm153, %v935, 0
  %938 = vmatpush.msra.mxu0 0.0
  %939 = vmatpush.msra.mxu0 0.0
  %940 = vmatpush.msra.mxu0 0.0
  %941 = vmatpush.msra.mxu0 0.0
  %942 = vmatpush.msra.mxu0 0.0
  %943 = vmatpush.msra.mxu0 0.0
  %944 = vmatpush.msra.mxu0 0.0
  %945 = vmatpush.msra.mxu0 0.0
  %946 = vmatpush.msra.mxu0 0.0
  %947 = vmatpush.msra.mxu0 0.0
  %948 = vmatpush.msra.mxu0 0.0
  %949 = vmatpush.msra.mxu0 0.0
  %950 = vmatpush.msra.mxu0 0.0
  %951 = vmatpush.msra.mxu0 0.0
  %952 = vmatpush.msra.mxu0 0.0
  %953 = vmatpush.msra.mxu0 %v159
  %954 = vmatmul.f32.gmra.mxu0 %v936
  %v955 = vpop.f32.mrf.mxu0
  %v956 = vadd.f32 %v151, %v955
  %957 = vdwg.mxu0
  %v958 = vadd.f32 %v106, %v956
  %v959 = vxor.u32 %v958, 2147483648
  %v960 = vmul.f32 %v959, 1.442695
  %v961 = vpow.pop %v960
  %v962 = vadd.f32 %v961, 1.0
  %v963 = vrcp.pop %v962
  %v964 = vmul.f32 %v962, %v963
  %v965 = vsub.f32 1.0, %v964
  %v966 = vmul.f32 %v963, %v965
  %v967 = vadd.f32 %v963, %v966
  %vm968 = vweird.f32 %v962
  %vm969 = vweird.f32 %v963
  %vm970 = vmor %vm968, %vm969
  %v971 = vsel %vm970, %v963, %v967
  %v972 = vand.u32 2147483647, %v962
  %vm973 = vcmp.eq.f32.partialorder %v972, 8.507059e+37
  %v974 = vand.u32 %v962, 2147483648
  %v975 = vor.u32 1.1754944e-38, %v974
  %v976 = vsel %vm973, %v975, %v971
  %v977 = vmul.f32 1.0, %v976
  %979 = vrot.lane.b32.xlu0 %v956, 124
  %v980 = vpop.permute.xlu0 %979
  %v982 = vmul.f32 %v977, %v980
  %984 = vrot.lane.b32.xlu0 %v982, 4
  %v985 = vpop.permute.xlu0 %984
  %v987 = vadd.f32 %v106, %v985
  %v988 = vtanh.pop %v987
  %v989 = vsub.f32 1.0, %v977
  %991 = vrot.lane.b32.xlu0 %v988, 126
  %v992 = vpop.permute.xlu0 %991
  %v994 = vmul.f32 %v989, %v992
  %v996 = vmul.f32 %v977, %v933
  %v997 = vadd.f32 %v994, %v996
  %998 = vmatpush.msra.mxu0 0.0
  %999 = vmatpush.msra.mxu0 0.0
  %1000 = vmatpush.msra.mxu0 0.0
  %1001 = vmatpush.msra.mxu0 0.0
  %1002 = vmatpush.msra.mxu0 0.0
  %1003 = vmatpush.msra.mxu0 0.0
  %1004 = vmatpush.msra.mxu0 0.0
  %1005 = vmatpush.msra.mxu0 0.0
  %1006 = vmatpush.msra.mxu0 0.0
  %1007 = vmatpush.msra.mxu0 0.0
  %1008 = vmatpush.msra.mxu0 0.0
  %1009 = vmatpush.msra.mxu0 0.0
  %1010 = vmatpush.msra.mxu0 0.0
  %1011 = vmatpush.msra.mxu0 0.0
  %1012 = vmatpush.msra.mxu0 0.0
  %1013 = vmatpush.msra.mxu0 %v51
  %1014 = vmatmul.f32.gmra.mxu0 %v889
  %v1015 = vpop.f32.mrf.mxu0
  %v1016 = vadd.f32 %v224, %v1015
  %1017 = vdwg.mxu0
  %v1018 = vadd.f32 %v143, %v1016
  %v1019 = vxor.u32 %v1018, 2147483648
  %v1020 = vmul.f32 %v1019, 1.442695
  %v1021 = vpow.pop %v1020
  %v1022 = vadd.f32 %v1021, 1.0
  %v1023 = vrcp.pop %v1022
  %v1024 = vmul.f32 %v1022, %v1023
  %v1025 = vsub.f32 1.0, %v1024
  %v1026 = vmul.f32 %v1023, %v1025
  %v1027 = vadd.f32 %v1023, %v1026
  %vm1028 = vweird.f32 %v1022
  %vm1029 = vweird.f32 %v1023
  %vm1030 = vmor %vm1028, %vm1029
  %v1031 = vsel %vm1030, %v1023, %v1027
  %v1032 = vand.u32 2147483647, %v1022
  %vm1033 = vcmp.eq.f32.partialorder %v1032, 8.507059e+37
  %v1034 = vand.u32 %v1022, 2147483648
  %v1035 = vor.u32 1.1754944e-38, %v1034
  %v1036 = vsel %vm1033, %v1035, %v1031
  %v1037 = vmul.f32 1.0, %v1036
  %1039 = vrot.lane.b32.xlu0 %v1016, 112
  %v1040 = vpop.permute.xlu0 %1039
  %v1042 = vmul.f32 %v1037, %v1040
  %1044 = vrot.lane.b32.xlu0 %v1042, 16
  %v1045 = vpop.permute.xlu0 %1044
  %v1047 = vadd.f32 %v143, %v1045
  %v1048 = vtanh.pop %v1047
  %v1049 = vsub.f32 1.0, %v1037
  %1051 = vrot.lane.b32.xlu0 %v1048, 120
  %v1052 = vpop.permute.xlu0 %1051
  %v1054 = vmul.f32 %v1049, %v1052
  %v1056 = vmul.f32 %v1037, %v886
  %v1057 = vadd.f32 %v1054, %v1056
  %v1058 = vsub.f32 0.0, %v997
  %v1059 = vmul.f32 %v1058, 1.442695
  %v1060 = vpow.pop %v1059
  %v1061 = vmul.f32 %v1060, %v299
  %v1062 = vsel %vm302, %v1061, 0.0
  %v1063 = vrot.slane %v1062, 4
  %v1064 = vadd.f32 %v1062, %v1063
  %v1065 = vrot.slane %v1064, 2
  %v1066 = vadd.f32 %v1064, %v1065
  %v1067 = vrot.slane %v1066, 1
  %v1068 = vadd.f32 %v1066, %v1067
  %v1069 = vmul.f32 %v1068, %v316
  %1071 = vrot.lane.b32.xlu0 %v1057, 120
  %v1072 = vpop.permute.xlu0 %1071
  %v1073 = vsel %vm226, %v1072, 0
  %1075 = vmatpush.msra.mxu0 0.0
  %1076 = vmatpush.msra.mxu0 0.0
  %1077 = vmatpush.msra.mxu0 0.0
  %1078 = vmatpush.msra.mxu0 0.0
  %1079 = vmatpush.msra.mxu0 0.0
  %1080 = vmatpush.msra.mxu0 0.0
  %1081 = vmatpush.msra.mxu0 0.0
  %1082 = vmatpush.msra.mxu0 0.0
  %1083 = vmatpush.msra.mxu0 0.0
  %1084 = vmatpush.msra.mxu0 0.0
  %1085 = vmatpush.msra.mxu0 0.0
  %1086 = vmatpush.msra.mxu0 0.0
  %1087 = vmatpush.msra.mxu0 0.0
  %1088 = vmatpush.msra.mxu0 0.0
  %1089 = vmatpush.msra.mxu0 0.0
  %1090 = vmatpush.msra.mxu0 %v53
  %1091 = vmatmul.f32.gmra.mxu0 %v1073
  %v1092 = vpop.f32.mrf.mxu0
  %v1093 = vadd.f32 %v319, %v1092
  %1094 = vdwg.mxu0
  %v1095 = vsub.f32 0.0, %v1093
  %v1096 = vmul.f32 %v1095, 1.442695
  %v1097 = vpow.pop %v1096
  %v1098 = vmul.f32 %v1097, %v296
  %1100 = vrot.lane.b32.xlu0 %v1098, 2
  %v1101 = vpop.permute.xlu0 %1100
  %v1103 = vadd.f32 %v1069, %v1101
  %1105 = vrot.lane.b32.xlu0 %v1103, 6
  %v1106 = vpop.permute.xlu0 %1105
  %vm1108 = vcmask 76864
  %1109 = vst.msk [vmem:[%s15] sm:$0xf] %vm1108, %v1106
  %1111 = vrot.lane.b32.xlu0 %v1093, 18
  %v1112 = vpop.permute.xlu0 %1111
  %vm1114 = vcmask 199840
  %1115 = vst.msk [vmem:[%s14] sm:$0xf] %vm1114, %v1112
  %1117 = vrot.lane.b32.xlu0 %v997, 126
  %v1118 = vpop.permute.xlu0 %1117
  %v1119 = vsel %vm153, %v1118, 0
  %1121 = vmatpush.msra.mxu0 0.0
  %1122 = vmatpush.msra.mxu0 0.0
  %1123 = vmatpush.msra.mxu0 0.0
  %1124 = vmatpush.msra.mxu0 0.0
  %1125 = vmatpush.msra.mxu0 0.0
  %1126 = vmatpush.msra.mxu0 0.0
  %1127 = vmatpush.msra.mxu0 0.0
  %1128 = vmatpush.msra.mxu0 0.0
  %1129 = vmatpush.msra.mxu0 0.0
  %1130 = vmatpush.msra.mxu0 0.0
  %1131 = vmatpush.msra.mxu0 0.0
  %1132 = vmatpush.msra.mxu0 0.0
  %1133 = vmatpush.msra.mxu0 0.0
  %1134 = vmatpush.msra.mxu0 0.0
  %1135 = vmatpush.msra.mxu0 0.0
  %1136 = vmatpush.msra.mxu0 %v159
  %1137 = vmatmul.f32.gmra.mxu0 %v1119
  %v1138 = vpop.f32.mrf.mxu0
  %v1139 = vadd.f32 %v151, %v1138
  %1140 = vdwg.mxu0
  %v1142 = vrot.slane %v1139, 4
  %v1144 = vadd.f32 %v106, %v1142
  %v1145 = vxor.u32 %v1144, 2147483648
  %v1146 = vmul.f32 %v1145, 1.442695
  %v1147 = vpow.pop %v1146
  %v1148 = vadd.f32 %v1147, 1.0
  %v1149 = vrcp.pop %v1148
  %v1150 = vmul.f32 %v1148, %v1149
  %v1151 = vsub.f32 1.0, %v1150
  %v1152 = vmul.f32 %v1149, %v1151
  %v1153 = vadd.f32 %v1149, %v1152
  %vm1154 = vweird.f32 %v1148
  %vm1155 = vweird.f32 %v1149
  %vm1156 = vmor %vm1154, %vm1155
  %v1157 = vsel %vm1156, %v1149, %v1153
  %v1158 = vand.u32 2147483647, %v1148
  %vm1159 = vcmp.eq.f32.partialorder %v1158, 8.507059e+37
  %v1160 = vand.u32 %v1148, 2147483648
  %v1161 = vor.u32 1.1754944e-38, %v1160
  %v1162 = vsel %vm1159, %v1161, %v1157
  %v1163 = vmul.f32 1.0, %v1162
  %1164 = vrot.lane.b32.xlu0 %v1142, 124
  %v1165 = vpop.permute.xlu0 %1164
  %v1167 = vmul.f32 %v1163, %v1165
  %1169 = vrot.lane.b32.xlu0 %v1167, 4
  %v1170 = vpop.permute.xlu0 %1169
  %v1172 = vadd.f32 %v106, %v1170
  %v1173 = vtanh.pop %v1172
  %v1174 = vsub.f32 1.0, %v1163
  %1176 = vrot.lane.b32.xlu0 %v1173, 126
  %v1177 = vpop.permute.xlu0 %1176
  %v1179 = vmul.f32 %v1174, %v1177
  %v1180 = vrot.slane %v997, 4
  %v1182 = vmul.f32 %v1163, %v1180
  %v1183 = vadd.f32 %v1179, %v1182
  %1184 = vmatpush.msra.mxu0 0.0
  %1185 = vmatpush.msra.mxu0 0.0
  %1186 = vmatpush.msra.mxu0 0.0
  %1187 = vmatpush.msra.mxu0 0.0
  %1188 = vmatpush.msra.mxu0 0.0
  %1189 = vmatpush.msra.mxu0 0.0
  %1190 = vmatpush.msra.mxu0 0.0
  %1191 = vmatpush.msra.mxu0 0.0
  %1192 = vmatpush.msra.mxu0 0.0
  %1193 = vmatpush.msra.mxu0 0.0
  %1194 = vmatpush.msra.mxu0 0.0
  %1195 = vmatpush.msra.mxu0 0.0
  %1196 = vmatpush.msra.mxu0 0.0
  %1197 = vmatpush.msra.mxu0 0.0
  %1198 = vmatpush.msra.mxu0 0.0
  %1199 = vmatpush.msra.mxu0 %v51
  %1200 = vmatmul.f32.gmra.mxu0 %v1073
  %v1201 = vpop.f32.mrf.mxu0
  %v1202 = vadd.f32 %v224, %v1201
  %1203 = vdwg.mxu0
  %v1205 = vrot.slane %v1202, 4
  %v1207 = vadd.f32 %v143, %v1205
  %v1208 = vxor.u32 %v1207, 2147483648
  %v1209 = vmul.f32 %v1208, 1.442695
  %v1210 = vpow.pop %v1209
  %v1211 = vadd.f32 %v1210, 1.0
  %v1212 = vrcp.pop %v1211
  %v1213 = vmul.f32 %v1211, %v1212
  %v1214 = vsub.f32 1.0, %v1213
  %v1215 = vmul.f32 %v1212, %v1214
  %v1216 = vadd.f32 %v1212, %v1215
  %vm1217 = vweird.f32 %v1211
  %vm1218 = vweird.f32 %v1212
  %vm1219 = vmor %vm1217, %vm1218
  %v1220 = vsel %vm1219, %v1212, %v1216
  %v1221 = vand.u32 2147483647, %v1211
  %vm1222 = vcmp.eq.f32.partialorder %v1221, 8.507059e+37
  %v1223 = vand.u32 %v1211, 2147483648
  %v1224 = vor.u32 1.1754944e-38, %v1223
  %v1225 = vsel %vm1222, %v1224, %v1220
  %v1226 = vmul.f32 1.0, %v1225
  %1227 = vrot.lane.b32.xlu0 %v1205, 112
  %v1228 = vpop.permute.xlu0 %1227
  %v1230 = vmul.f32 %v1226, %v1228
  %1232 = vrot.lane.b32.xlu0 %v1230, 16
  %v1233 = vpop.permute.xlu0 %1232
  %v1235 = vadd.f32 %v143, %v1233
  %v1236 = vtanh.pop %v1235
  %v1237 = vsub.f32 1.0, %v1226
  %1239 = vrot.lane.b32.xlu0 %v1236, 120
  %v1240 = vpop.permute.xlu0 %1239
  %v1242 = vmul.f32 %v1237, %v1240
  %v1243 = vrot.slane %v1057, 4
  %v1245 = vmul.f32 %v1226, %v1243
  %v1246 = vadd.f32 %v1242, %v1245
  %v1247 = vsub.f32 0.0, %v1183
  %v1248 = vmul.f32 %v1247, 1.442695
  %v1249 = vpow.pop %v1248
  %v1250 = vmul.f32 %v1249, %v299
  %v1252 = vrot.slane %v1250, 4
  %v1254 = vsel %vm302, %v1252, 0.0
  %v1255 = vrot.slane %v1254, 4
  %v1256 = vadd.f32 %v1254, %v1255
  %v1257 = vrot.slane %v1256, 2
  %v1258 = vadd.f32 %v1256, %v1257
  %v1259 = vrot.slane %v1258, 1
  %v1260 = vadd.f32 %v1258, %v1259
  %v1261 = vmul.f32 %v1260, %v316
  %v1263 = vrot.slane %v1246, 4
  %1264 = vrot.lane.b32.xlu0 %v1263, 120
  %v1265 = vpop.permute.xlu0 %1264
  %v1266 = vsel %vm226, %v1265, 0
  %1268 = vmatpush.msra.mxu0 0.0
  %1269 = vmatpush.msra.mxu0 0.0
  %1270 = vmatpush.msra.mxu0 0.0
  %1271 = vmatpush.msra.mxu0 0.0
  %1272 = vmatpush.msra.mxu0 0.0
  %1273 = vmatpush.msra.mxu0 0.0
  %1274 = vmatpush.msra.mxu0 0.0
  %1275 = vmatpush.msra.mxu0 0.0
  %1276 = vmatpush.msra.mxu0 0.0
  %1277 = vmatpush.msra.mxu0 0.0
  %1278 = vmatpush.msra.mxu0 0.0
  %1279 = vmatpush.msra.mxu0 0.0
  %1280 = vmatpush.msra.mxu0 0.0
  %1281 = vmatpush.msra.mxu0 0.0
  %1282 = vmatpush.msra.mxu0 0.0
  %1283 = vmatpush.msra.mxu0 %v53
  %1284 = vmatmul.f32.gmra.mxu0 %v1266
  %v1285 = vpop.f32.mrf.mxu0
  %v1286 = vadd.f32 %v319, %v1285
  %1287 = vdwg.mxu0
  %v1288 = vsub.f32 0.0, %v1286
  %v1289 = vmul.f32 %v1288, 1.442695
  %v1290 = vpow.pop %v1289
  %v1291 = vmul.f32 %v1290, %v296
  %1293 = vrot.lane.b32.xlu0 %v1291, 2
  %v1294 = vpop.permute.xlu0 %1293
  %v1296 = vadd.f32 %v1261, %v1294
  %1298 = vrot.lane.b32.xlu0 %v1296, 8
  %v1299 = vpop.permute.xlu0 %1298
  %vm1301 = vcmask 93264
  %1302 = vst.msk [vmem:[%s15] sm:$0xf] %vm1301, %v1299
  %1304 = vrot.lane.b32.xlu0 %v1286, 23
  %v1305 = vpop.permute.xlu0 %1304
  %vm1307 = vcmask 240840
  %1308 = vst.msk [vmem:[%s14] sm:$0xf] %vm1307, %v1305
  %v1310 = vrot.slane %v1183, 4
  %1311 = vrot.lane.b32.xlu0 %v1310, 126
  %v1312 = vpop.permute.xlu0 %1311
  %v1313 = vsel %vm153, %v1312, 0
  %1315 = vmatpush.msra.mxu0 0.0
  %1316 = vmatpush.msra.mxu0 0.0
  %1317 = vmatpush.msra.mxu0 0.0
  %1318 = vmatpush.msra.mxu0 0.0
  %1319 = vmatpush.msra.mxu0 0.0
  %1320 = vmatpush.msra.mxu0 0.0
  %1321 = vmatpush.msra.mxu0 0.0
  %1322 = vmatpush.msra.mxu0 0.0
  %1323 = vmatpush.msra.mxu0 0.0
  %1324 = vmatpush.msra.mxu0 0.0
  %1325 = vmatpush.msra.mxu0 0.0
  %1326 = vmatpush.msra.mxu0 0.0
  %1327 = vmatpush.msra.mxu0 0.0
  %1328 = vmatpush.msra.mxu0 0.0
  %1329 = vmatpush.msra.mxu0 0.0
  %1330 = vmatpush.msra.mxu0 %v159
  %1331 = vmatmul.f32.gmra.mxu0 %v1313
  %v1332 = vpop.f32.mrf.mxu0
  %v1333 = vadd.f32 %v151, %v1332
  %1334 = vdwg.mxu0
  %v1335 = vadd.f32 %v109, %v1333
  %v1336 = vxor.u32 %v1335, 2147483648
  %v1337 = vmul.f32 %v1336, 1.442695
  %v1338 = vpow.pop %v1337
  %v1339 = vadd.f32 %v1338, 1.0
  %v1340 = vrcp.pop %v1339
  %v1341 = vmul.f32 %v1339, %v1340
  %v1342 = vsub.f32 1.0, %v1341
  %v1343 = vmul.f32 %v1340, %v1342
  %v1344 = vadd.f32 %v1340, %v1343
  %vm1345 = vweird.f32 %v1339
  %vm1346 = vweird.f32 %v1340
  %vm1347 = vmor %vm1345, %vm1346
  %v1348 = vsel %vm1347, %v1340, %v1344
  %v1349 = vand.u32 2147483647, %v1339
  %vm1350 = vcmp.eq.f32.partialorder %v1349, 8.507059e+37
  %v1351 = vand.u32 %v1339, 2147483648
  %v1352 = vor.u32 1.1754944e-38, %v1351
  %v1353 = vsel %vm1350, %v1352, %v1348
  %v1354 = vmul.f32 1.0, %v1353
  %1356 = vrot.lane.b32.xlu0 %v1333, 124
  %v1357 = vpop.permute.xlu0 %1356
  %v1359 = vmul.f32 %v1354, %v1357
  %1361 = vrot.lane.b32.xlu0 %v1359, 4
  %v1362 = vpop.permute.xlu0 %1361
  %v1364 = vadd.f32 %v109, %v1362
  %v1365 = vtanh.pop %v1364
  %v1366 = vsub.f32 1.0, %v1354
  %1368 = vrot.lane.b32.xlu0 %v1365, 126
  %v1369 = vpop.permute.xlu0 %1368
  %v1371 = vmul.f32 %v1366, %v1369
  %v1373 = vmul.f32 %v1354, %v1310
  %v1374 = vadd.f32 %v1371, %v1373
  %1375 = vmatpush.msra.mxu0 0.0
  %1376 = vmatpush.msra.mxu0 0.0
  %1377 = vmatpush.msra.mxu0 0.0
  %1378 = vmatpush.msra.mxu0 0.0
  %1379 = vmatpush.msra.mxu0 0.0
  %1380 = vmatpush.msra.mxu0 0.0
  %1381 = vmatpush.msra.mxu0 0.0
  %1382 = vmatpush.msra.mxu0 0.0
  %1383 = vmatpush.msra.mxu0 0.0
  %1384 = vmatpush.msra.mxu0 0.0
  %1385 = vmatpush.msra.mxu0 0.0
  %1386 = vmatpush.msra.mxu0 0.0
  %1387 = vmatpush.msra.mxu0 0.0
  %1388 = vmatpush.msra.mxu0 0.0
  %1389 = vmatpush.msra.mxu0 0.0
  %1390 = vmatpush.msra.mxu0 %v51
  %1391 = vmatmul.f32.gmra.mxu0 %v1266
  %v1392 = vpop.f32.mrf.mxu0
  %v1393 = vadd.f32 %v224, %v1392
  %1394 = vdwg.mxu0
  %v1395 = vadd.f32 %v146, %v1393
  %v1396 = vxor.u32 %v1395, 2147483648
  %v1397 = vmul.f32 %v1396, 1.442695
  %v1398 = vpow.pop %v1397
  %v1399 = vadd.f32 %v1398, 1.0
  %v1400 = vrcp.pop %v1399
  %v1401 = vmul.f32 %v1399, %v1400
  %v1402 = vsub.f32 1.0, %v1401
  %v1403 = vmul.f32 %v1400, %v1402
  %v1404 = vadd.f32 %v1400, %v1403
  %vm1405 = vweird.f32 %v1399
  %vm1406 = vweird.f32 %v1400
  %vm1407 = vmor %vm1405, %vm1406
  %v1408 = vsel %vm1407, %v1400, %v1404
  %v1409 = vand.u32 2147483647, %v1399
  %vm1410 = vcmp.eq.f32.partialorder %v1409, 8.507059e+37
  %v1411 = vand.u32 %v1399, 2147483648
  %v1412 = vor.u32 1.1754944e-38, %v1411
  %v1413 = vsel %vm1410, %v1412, %v1408
  %v1414 = vmul.f32 1.0, %v1413
  %1416 = vrot.lane.b32.xlu0 %v1393, 112
  %v1417 = vpop.permute.xlu0 %1416
  %v1419 = vmul.f32 %v1414, %v1417
  %1421 = vrot.lane.b32.xlu0 %v1419, 16
  %v1422 = vpop.permute.xlu0 %1421
  %v1424 = vadd.f32 %v146, %v1422
  %v1425 = vtanh.pop %v1424
  %v1426 = vsub.f32 1.0, %v1414
  %1428 = vrot.lane.b32.xlu0 %v1425, 120
  %v1429 = vpop.permute.xlu0 %1428
  %v1431 = vmul.f32 %v1426, %v1429
  %v1433 = vmul.f32 %v1414, %v1263
  %v1434 = vadd.f32 %v1431, %v1433
  %v1435 = vsub.f32 0.0, %v1374
  %v1436 = vmul.f32 %v1435, 1.442695
  %v1437 = vpow.pop %v1436
  %v1438 = vmul.f32 %v1437, %v299
  %v1439 = vsel %vm302, %v1438, 0.0
  %v1440 = vrot.slane %v1439, 4
  %v1441 = vadd.f32 %v1439, %v1440
  %v1442 = vrot.slane %v1441, 2
  %v1443 = vadd.f32 %v1441, %v1442
  %v1444 = vrot.slane %v1443, 1
  %v1445 = vadd.f32 %v1443, %v1444
  %v1446 = vmul.f32 %v1445, %v316
  %1448 = vrot.lane.b32.xlu0 %v1434, 120
  %v1449 = vpop.permute.xlu0 %1448
  %v1450 = vsel %vm226, %v1449, 0
  %1452 = vmatpush.msra.mxu0 0.0
  %1453 = vmatpush.msra.mxu0 0.0
  %1454 = vmatpush.msra.mxu0 0.0
  %1455 = vmatpush.msra.mxu0 0.0
  %1456 = vmatpush.msra.mxu0 0.0
  %1457 = vmatpush.msra.mxu0 0.0
  %1458 = vmatpush.msra.mxu0 0.0
  %1459 = vmatpush.msra.mxu0 0.0
  %1460 = vmatpush.msra.mxu0 0.0
  %1461 = vmatpush.msra.mxu0 0.0
  %1462 = vmatpush.msra.mxu0 0.0
  %1463 = vmatpush.msra.mxu0 0.0
  %1464 = vmatpush.msra.mxu0 0.0
  %1465 = vmatpush.msra.mxu0 0.0
  %1466 = vmatpush.msra.mxu0 0.0
  %1467 = vmatpush.msra.mxu0 %v53
  %1468 = vmatmul.f32.gmra.mxu0 %v1450
  %v1469 = vpop.f32.mrf.mxu0
  %v1470 = vadd.f32 %v319, %v1469
  %1471 = vdwg.mxu0
  %v1472 = vsub.f32 0.0, %v1470
  %v1473 = vmul.f32 %v1472, 1.442695
  %v1474 = vpow.pop %v1473
  %v1475 = vmul.f32 %v1474, %v296
  %1477 = vrot.lane.b32.xlu0 %v1475, 2
  %v1478 = vpop.permute.xlu0 %1477
  %v1480 = vadd.f32 %v1446, %v1478
  %1482 = vrot.lane.b32.xlu0 %v1480, 10
  %v1483 = vpop.permute.xlu0 %1482
  %vm1485 = vcmask 109664
  %1486 = vst.msk [vmem:[%s15] sm:$0xf] %vm1485, %v1483
  %1488 = vrot.lane.b32.xlu0 %v1470, 28
  %v1489 = vpop.permute.xlu0 %1488
  %vm1491 = vcmask 281840
  %1492 = vst.msk [vmem:[%s14] sm:$0xf] %vm1491, %v1489
  %1494 = vrot.lane.b32.xlu0 %v1374, 126
  %v1495 = vpop.permute.xlu0 %1494
  %v1496 = vsel %vm153, %v1495, 0
  %1498 = vmatpush.msra.mxu0 0.0
  %1499 = vmatpush.msra.mxu0 0.0
  %1500 = vmatpush.msra.mxu0 0.0
  %1501 = vmatpush.msra.mxu0 0.0
  %1502 = vmatpush.msra.mxu0 0.0
  %1503 = vmatpush.msra.mxu0 0.0
  %1504 = vmatpush.msra.mxu0 0.0
  %1505 = vmatpush.msra.mxu0 0.0
  %1506 = vmatpush.msra.mxu0 0.0
  %1507 = vmatpush.msra.mxu0 0.0
  %1508 = vmatpush.msra.mxu0 0.0
  %1509 = vmatpush.msra.mxu0 0.0
  %1510 = vmatpush.msra.mxu0 0.0
  %1511 = vmatpush.msra.mxu0 0.0
  %1512 = vmatpush.msra.mxu0 0.0
  %1513 = vmatpush.msra.mxu0 %v159
  %1514 = vmatmul.f32.gmra.mxu0 %v1496
  %v1515 = vpop.f32.mrf.mxu0
  %v1516 = vadd.f32 %v151, %v1515
  %1517 = vdwg.mxu0
  %v1519 = vrot.slane %v1516, 4
  %v1521 = vadd.f32 %v109, %v1519
  %v1522 = vxor.u32 %v1521, 2147483648
  %v1523 = vmul.f32 %v1522, 1.442695
  %v1524 = vpow.pop %v1523
  %v1525 = vadd.f32 %v1524, 1.0
  %v1526 = vrcp.pop %v1525
  %v1527 = vmul.f32 %v1525, %v1526
  %v1528 = vsub.f32 1.0, %v1527
  %v1529 = vmul.f32 %v1526, %v1528
  %v1530 = vadd.f32 %v1526, %v1529
  %vm1531 = vweird.f32 %v1525
  %vm1532 = vweird.f32 %v1526
  %vm1533 = vmor %vm1531, %vm1532
  %v1534 = vsel %vm1533, %v1526, %v1530
  %v1535 = vand.u32 2147483647, %v1525
  %vm1536 = vcmp.eq.f32.partialorder %v1535, 8.507059e+37
  %v1537 = vand.u32 %v1525, 2147483648
  %v1538 = vor.u32 1.1754944e-38, %v1537
  %v1539 = vsel %vm1536, %v1538, %v1534
  %v1540 = vmul.f32 1.0, %v1539
  %1541 = vrot.lane.b32.xlu0 %v1519, 124
  %v1542 = vpop.permute.xlu0 %1541
  %v1544 = vmul.f32 %v1540, %v1542
  %1546 = vrot.lane.b32.xlu0 %v1544, 4
  %v1547 = vpop.permute.xlu0 %1546
  %v1549 = vadd.f32 %v109, %v1547
  %v1550 = vtanh.pop %v1549
  %v1551 = vsub.f32 1.0, %v1540
  %1553 = vrot.lane.b32.xlu0 %v1550, 126
  %v1554 = vpop.permute.xlu0 %1553
  %v1556 = vmul.f32 %v1551, %v1554
  %v1557 = vrot.slane %v1374, 4
  %v1559 = vmul.f32 %v1540, %v1557
  %v1560 = vadd.f32 %v1556, %v1559
  %1561 = vmatpush.msra.mxu0 0.0
  %1562 = vmatpush.msra.mxu0 0.0
  %1563 = vmatpush.msra.mxu0 0.0
  %1564 = vmatpush.msra.mxu0 0.0
  %1565 = vmatpush.msra.mxu0 0.0
  %1566 = vmatpush.msra.mxu0 0.0
  %1567 = vmatpush.msra.mxu0 0.0
  %1568 = vmatpush.msra.mxu0 0.0
  %1569 = vmatpush.msra.mxu0 0.0
  %1570 = vmatpush.msra.mxu0 0.0
  %1571 = vmatpush.msra.mxu0 0.0
  %1572 = vmatpush.msra.mxu0 0.0
  %1573 = vmatpush.msra.mxu0 0.0
  %1574 = vmatpush.msra.mxu0 0.0
  %1575 = vmatpush.msra.mxu0 0.0
  %1576 = vmatpush.msra.mxu0 %v51
  %1577 = vmatmul.f32.gmra.mxu0 %v1450
  %v1578 = vpop.f32.mrf.mxu0
  %v1579 = vadd.f32 %v224, %v1578
  %1580 = vdwg.mxu0
  %v1582 = vrot.slane %v1579, 4
  %v1584 = vadd.f32 %v146, %v1582
  %v1585 = vxor.u32 %v1584, 2147483648
  %v1586 = vmul.f32 %v1585, 1.442695
  %v1587 = vpow.pop %v1586
  %v1588 = vadd.f32 %v1587, 1.0
  %v1589 = vrcp.pop %v1588
  %v1590 = vmul.f32 %v1588, %v1589
  %v1591 = vsub.f32 1.0, %v1590
  %v1592 = vmul.f32 %v1589, %v1591
  %v1593 = vadd.f32 %v1589, %v1592
  %vm1594 = vweird.f32 %v1588
  %vm1595 = vweird.f32 %v1589
  %vm1596 = vmor %vm1594, %vm1595
  %v1597 = vsel %vm1596, %v1589, %v1593
  %v1598 = vand.u32 2147483647, %v1588
  %vm1599 = vcmp.eq.f32.partialorder %v1598, 8.507059e+37
  %v1600 = vand.u32 %v1588, 2147483648
  %v1601 = vor.u32 1.1754944e-38, %v1600
  %v1602 = vsel %vm1599, %v1601, %v1597
  %v1603 = vmul.f32 1.0, %v1602
  %1604 = vrot.lane.b32.xlu0 %v1582, 112
  %v1605 = vpop.permute.xlu0 %1604
  %v1607 = vmul.f32 %v1603, %v1605
  %1609 = vrot.lane.b32.xlu0 %v1607, 16
  %v1610 = vpop.permute.xlu0 %1609
  %v1612 = vadd.f32 %v146, %v1610
  %v1613 = vtanh.pop %v1612
  %v1614 = vsub.f32 1.0, %v1603
  %1616 = vrot.lane.b32.xlu0 %v1613, 120
  %v1617 = vpop.permute.xlu0 %1616
  %v1619 = vmul.f32 %v1614, %v1617
  %v1620 = vrot.slane %v1434, 4
  %v1622 = vmul.f32 %v1603, %v1620
  %v1623 = vadd.f32 %v1619, %v1622
  %v1624 = vsub.f32 0.0, %v1560
  %v1625 = vmul.f32 %v1624, 1.442695
  %v1626 = vpow.pop %v1625
  %v1627 = vmul.f32 %v1626, %v299
  %v1629 = vrot.slane %v1627, 4
  %v1631 = vsel %vm302, %v1629, 0.0
  %v1632 = vrot.slane %v1631, 4
  %v1633 = vadd.f32 %v1631, %v1632
  %v1634 = vrot.slane %v1633, 2
  %v1635 = vadd.f32 %v1633, %v1634
  %v1636 = vrot.slane %v1635, 1
  %v1637 = vadd.f32 %v1635, %v1636
  %v1638 = vmul.f32 %v1637, %v316
  %v1640 = vrot.slane %v1623, 4
  %1641 = vrot.lane.b32.xlu0 %v1640, 120
  %v1642 = vpop.permute.xlu0 %1641
  %v1643 = vsel %vm226, %v1642, 0
  %1645 = vmatpush.msra.mxu0 0.0
  %1646 = vmatpush.msra.mxu0 0.0
  %1647 = vmatpush.msra.mxu0 0.0
  %1648 = vmatpush.msra.mxu0 0.0
  %1649 = vmatpush.msra.mxu0 0.0
  %1650 = vmatpush.msra.mxu0 0.0
  %1651 = vmatpush.msra.mxu0 0.0
  %1652 = vmatpush.msra.mxu0 0.0
  %1653 = vmatpush.msra.mxu0 0.0
  %1654 = vmatpush.msra.mxu0 0.0
  %1655 = vmatpush.msra.mxu0 0.0
  %1656 = vmatpush.msra.mxu0 0.0
  %1657 = vmatpush.msra.mxu0 0.0
  %1658 = vmatpush.msra.mxu0 0.0
  %1659 = vmatpush.msra.mxu0 0.0
  %1660 = vmatpush.msra.mxu0 %v53
  %1661 = vmatmul.f32.gmra.mxu0 %v1643
  %v1662 = vpop.f32.mrf.mxu0
  %v1663 = vadd.f32 %v319, %v1662
  %1664 = vdwg.mxu0
  %v1665 = vsub.f32 0.0, %v1663
  %v1666 = vmul.f32 %v1665, 1.442695
  %v1667 = vpow.pop %v1666
  %v1668 = vmul.f32 %v1667, %v296
  %1670 = vrot.lane.b32.xlu0 %v1668, 2
  %v1671 = vpop.permute.xlu0 %1670
  %v1673 = vadd.f32 %v1638, %v1671
  %1675 = vrot.lane.b32.xlu0 %v1673, 12
  %v1676 = vpop.permute.xlu0 %1675
  %vm1678 = vcmask 126064
  %1679 = vst.msk [vmem:[%s15] sm:$0xf] %vm1678, %v1676
  // Predicated region
  $region58: #{global_plus_eps_forward.1} parent=0 // pred_check
    _
  $region59: #{global_plus_eps_forward.1} parent=0 // pred_check_branch
    %1681 = sbr.rel (0) target = $region61
  $region60: #{global_plus_eps_forward.1} parent=0 // pred_region
    _
  $region61: #{global_plus_eps_forward.1} parent=0 // pred_fallthru
    _
  // Predicated region
  $region62: #{global_plus_eps_forward.1} parent=0 // pred_check
    _
  $region63: #{global_plus_eps_forward.1} parent=0 // pred_check_branch
    %1683 = sbr.rel (0) target = $region65
  $region64: #{global_plus_eps_forward.1} parent=0 // pred_region
    _
  $region65: #{global_plus_eps_forward.1} parent=0 // pred_fallthru
    _
  // Predicated region
  $region66: #{global_plus_eps_forward.1} parent=0 // pred_check
    _
  $region67: #{global_plus_eps_forward.1} parent=0 // pred_check_branch
    %1685 = sbr.rel (0) target = $region69
  $region68: #{global_plus_eps_forward.1} parent=0 // pred_region
    _
  $region69: #{global_plus_eps_forward.1} parent=0 // pred_fallthru
    _
  // Predicated region
  $region70: #{global_plus_eps_forward.1} parent=0 // pred_check
    _
  $region71: #{global_plus_eps_forward.1} parent=0 // pred_check_branch
    %1687 = sbr.rel (0) target = $region73
  $region72: #{global_plus_eps_forward.1} parent=0 // pred_region
    _
  $region73: #{global_plus_eps_forward.1} parent=0 // pred_fallthru
    _

</llo_original>
